<compile_context>
chip_gen: v6e
topology: v6e:2x2x1
jax: 0.10.0
libtpu: 0.0.40
codegen_flags: <defaults>
</compile_context>

<pallas_src>
import functools

import jax
import jax.numpy as jnp
from jax.experimental import pallas as pl
from jax.experimental.pallas import tpu as pltpu

EPS = 1e-5  # nn.LayerNorm default


def _layernorm(x, gamma, beta):
    # Single reduction pass: mean and E[x^2], var = E[x^2] - mean^2.
    mean = jnp.mean(x, axis=-1, keepdims=True)
    ex2 = jnp.mean(x * x, axis=-1, keepdims=True)
    var = ex2 - mean * mean
    return (x - mean) * jax.lax.rsqrt(var + EPS) * gamma + beta


# ---------------------------------------------------------------------------
# Fused kernel: bottleneck -> depth x MixerBlock -> head (all VMEM-resident)
# ---------------------------------------------------------------------------
def fused_mixer_kernel(x_ref, wio_ref, blkw_ref, vrow_ref, vcol_ref, o_ref,
                       *, dims, use_sigmoid):
    H, P, S, Dt, Dc, C, depth = (dims[k] for k in
                                 ("H", "P", "S", "Dt", "Dc", "C", "depth"))
    B = x_ref.shape[0]
    R = B * S
    bf16 = jnp.bfloat16
    f32 = jnp.float32

    # Load the packed parameter blobs once; everything below is value math.
    wio = wio_ref[...]        # (H+P, max(P,C))      bf16
    blkw = blkw_ref[...]      # (depth, 4, M4, M4)   bf16
    vrow = vrow_ref[...]      # (1+6*depth+3, Vm)    f32
    vcol = vcol_ref[...]      # (depth, Dt+S, 1)     f32

    # ---- bottleneck: batch folded into the matmul M dimension --------------
    x2 = x_ref[...].reshape(R, H).astype(bf16)
    bw = wio[:H, :P]                                          # (H, P) bf16
    bb = vrow[0:1, :P]                                        # (1, P) f32
    y = jnp.dot(x2, bw, preferred_element_type=f32) + bb      # (R, P) f32

    # ---- mixer blocks (depth small & static -> Python unrolled) ------------
    for d in range(depth):
        base = 1 + 6 * d
        ln1_g = vrow[base + 0:base + 1, :P]
        ln1_b = vrow[base + 1:base + 2, :P]
        ln2_g = vrow[base + 2:base + 3, :P]
        ln2_b = vrow[base + 3:base + 4, :P]
        cb1 = vrow[base + 4:base + 5, :Dc]
        cb2 = vrow[base + 5:base + 6, :P]
        wd = blkw[d]                       # (4, M4, M4) bf16
        tw1T = wd[0, :Dt, :S]              # = tw1.T  (Dt, S)
        tw2T = wd[1, :S, :Dt]              # = tw2.T  (S, Dt)
        cw1 = wd[2, :P, :Dc]               # (P, Dc)
        cw2 = wd[3, :Dc, :P]               # (Dc, P)
        tb1c = vcol[d, :Dt, :]             # (Dt, 1) column bias
        tb2c = vcol[d, Dt:Dt + S, :]       # (S, 1)  column bias

        # token mixing: contract over S with pre-transposed weights; results
        # land directly in (S, P) layout -> no in-kernel transposes.
        t = _layernorm(y, ln1_g, ln1_b).astype(bf16)          # (R, P)
        u_rows = []
        for b in range(B):  # TODO(synk): use a batched dot_general for large B
            t_b = t[b * S:(b + 1) * S, :]                     # (S, P)
            hT = jax.nn.gelu(
                jnp.dot(tw1T, t_b, preferred_element_type=f32) + tb1c,
                approximate=True)                             # (Dt, P) f32
            u_b = jnp.dot(tw2T, hT.astype(bf16),
                          preferred_element_type=f32) + tb2c  # (S, P) f32
            u_rows.append(u_b)
        y = y + jnp.concatenate(u_rows, axis=0)               # (R, P)

        # channel mixing: batch stays folded into matmul M.
        c = _layernorm(y, ln2_g, ln2_b).astype(bf16)          # (R, P)
        h2 = jax.nn.gelu(
            jnp.dot(c, cw1, preferred_element_type=f32) + cb1,
            approximate=True)                                 # (R, Dc)
        y = y + jnp.dot(h2.astype(bf16), cw2, preferred_element_type=f32) + cb2

    # ---- head: LN -> mean over tokens -> (B,P)@(P,C) -> sigmoid/softmax ----
    hrow = 1 + 6 * depth
    hln_g = vrow[hrow + 0:hrow + 1, :P]
    hln_b = vrow[hrow + 1:hrow + 2, :P]
    hb = vrow[hrow + 2:hrow + 3, :C]
    hw = wio[H:H + P, :C]                                     # (P, C) bf16

    z = _layernorm(y, hln_g, hln_b)                           # (R, P)
    pooled = jnp.mean(z.reshape(B, S, P), axis=1)             # (B, P)
    logits = jnp.dot(pooled.astype(bf16), hw, preferred_element_type=f32) + hb
    if use_sigmoid:
        o_ref[...] = jax.nn.sigmoid(logits)
    else:
        o_ref[...] = jax.nn.softmax(logits, axis=-1)


# ---------------------------------------------------------------------------
# Host-side parameter packing: 18 tensors -> 4 lane-dense blobs
# ---------------------------------------------------------------------------
def pack_params(params):
    f32, bf16 = jnp.float32, jnp.bfloat16
    bw, bb = params["bw"], params["bb"]
    H, P = bw.shape
    hw, hb = params["hw"], params["hb"]
    C = hw.shape[1]
    depth, S, Dt = params["tw1"].shape
    Dc = params["cw1"].shape[2]

    # 1) bottleneck + head weights (bf16)
    Wio = max(P, C)
    w_io = jnp.zeros((H + P, Wio), f32)
    w_io = w_io.at[:H, :P].set(bw)
    w_io = w_io.at[H:H + P, :C].set(hw)
    w_io = w_io.astype(bf16)

    # 2) per-block matmul weights, token weights pre-transposed (bf16)
    M4 = max(S, Dt, P, Dc)
    blk_w = jnp.zeros((depth, 4, M4, M4), f32)
    blk_w = blk_w.at[:, 0, :Dt, :S].set(jnp.swapaxes(params["tw1"], 1, 2))
    blk_w = blk_w.at[:, 1, :S, :Dt].set(jnp.swapaxes(params["tw2"], 1, 2))
    blk_w = blk_w.at[:, 2, :P, :Dc].set(params["cw1"])
    blk_w = blk_w.at[:, 3, :Dc, :P].set(params["cw2"])
    blk_w = blk_w.astype(bf16)

    # 3) row-vector params (broadcast along lanes)
    Vm = max(P, Dc, C)

    def row(v):
        return jnp.zeros((Vm,), f32).at[:v.shape[0]].set(v)

    rows = [row(bb)]
    for d in range(depth):
        rows += [row(params["ln1_g"][d]), row(params["ln1_b"][d]),
                 row(params["ln2_g"][d]), row(params["ln2_b"][d]),
                 row(params["cb1"][d]), row(params["cb2"][d])]
    rows += [row(params["hln_g"]), row(params["hln_b"]), row(hb)]
    vec_rows = jnp.stack(rows, axis=0)

    # 4) column-vector params (token-MLP biases, broadcast along lanes)
    vec_cols = jnp.zeros((depth, Dt + S, 1), f32)
    vec_cols = vec_cols.at[:, :Dt, 0].set(params["tb1"])
    vec_cols = vec_cols.at[:, Dt:Dt + S, 0].set(params["tb2"])

    dims = dict(H=H, P=P, S=S, Dt=Dt, Dc=Dc, C=C, depth=depth)
    return (w_io, blk_w, vec_rows, vec_cols), dims


def nlp_mixer_forward(x, params, nb_classes):
    """Fused forward pass (single gridless pallas_call, single TensorCore)."""
    B, S, H = x.shape
    use_sigmoid = nb_classes <= 2
    packed, dims = pack_params(params)
    assert dims["S"] == S and dims["H"] == H
    C = dims["C"]

    out = pl.pallas_call(
        functools.partial(fused_mixer_kernel, dims=dims, use_sigmoid=use_sigmoid),
        out_shape=jax.ShapeDtypeStruct((B, C), jnp.float32),
        # Gridless single invocation: no per-step grid overhead, no
        # double-buffered weight copies.  Raise scoped-VMEM cap for headroom
        # (v5e default is only 16 MiB) if shapes grow.
        compiler_params=pltpu.CompilerParams(vmem_limit_bytes=32 * 1024 * 1024),
    )(x, *packed)

    if use_sigmoid:
        return jnp.squeeze(out)   # torch.sigmoid(torch.squeeze(x))
    return out                    # torch.softmax(x, 1) -> (B, C)


# ---------------------------------------------------------------------------
# Pure-JAX reference (f32 HIGHEST, exact GELU) for correctness check
# ---------------------------------------------------------------------------
def reference_forward(x, params, nb_classes):
    HP = jax.lax.Precision.HIGHEST

    def ln(v, g, b):
        m = v.mean(-1, keepdims=True)
        var = ((v - m) ** 2).mean(-1, keepdims=True)
        return (v - m) / jnp.sqrt(var + EPS) * g + b

    y = jnp.einsum("bsh,hp->bsp", x, params["bw"], precision=HP) + params["bb"]
    depth = params["tw1"].shape[0]
    for d in range(depth):
        t = ln(y, params["ln1_g"][d], params["ln1_b"][d])
        t = jnp.swapaxes(t, 1, 2)                                     # (B, P, S)
        t = jax.nn.gelu(
            jnp.einsum("bps,sd->bpd", t, params["tw1"][d], precision=HP)
            + params["tb1"][d], approximate=False)
        t = jnp.einsum("bpd,ds->bps", t, params["tw2"][d], precision=HP) + params["tb2"][d]
        y = y + jnp.swapaxes(t, 1, 2)
        c = ln(y, params["ln2_g"][d], params["ln2_b"][d])
        c = jax.nn.gelu(
            jnp.einsum("bsp,pd->bsd", c, params["cw1"][d], precision=HP)
            + params["cb1"][d], approximate=False)
        y = y + jnp.einsum("bsd,dp->bsp", c, params["cw2"][d], precision=HP) + params["cb2"][d]
    y = ln(y, params["hln_g"], params["hln_b"])
    pooled = y.mean(axis=1)
    logits = jnp.einsum("bp,pc->bc", pooled, params["hw"], precision=HP) + params["hb"]
    if nb_classes <= 2:
        return jax.nn.sigmoid(jnp.squeeze(logits))
    return jax.nn.softmax(logits, axis=1)


# ---------------------------------------------------------------------------
if __name__ == "__main__":
    # Small shapes consistent with the module's forward.
    B = 2
    sentence_length = 8       # S
    bloom_length = 32
    window_size = 1
    bottleneck_param = 32     # P
    mixer_token_dim = 32      # Dt
    mixer_channel_dim = 32    # Dc
    depth = 2
    nb_classes = 1            # default (None -> 1) => sigmoid head

    h_proj = (2 * window_size + 1) * bloom_length  # 96

    key = jax.random.PRNGKey(0)
    keys = iter(jax.random.split(key, 64))

    def linear(fan_in, fan_out):
        scale = 1.0 / jnp.sqrt(jnp.float32(fan_in))
        w = jax.random.normal(next(keys), (fan_in, fan_out), jnp.float32) * scale
        b = jax.random.normal(next(keys), (fan_out,), jnp.float32) * 0.01
        return w, b

    blocks = []
    for _ in range(depth):
        blk = {}
        blk["ln1_g"] = jnp.ones((bottleneck_param,), jnp.float32)
        blk["ln1_b"] = jnp.zeros((bottleneck_param,), jnp.float32)
        blk["tw1"], blk["tb1"] = linear(sentence_length, mixer_token_dim)
        blk["tw2"], blk["tb2"] = linear(mixer_token_dim, sentence_length)
        blk["ln2_g"] = jnp.ones((bottleneck_param,), jnp.float32)
        blk["ln2_b"] = jnp.zeros((bottleneck_param,), jnp.float32)
        blk["cw1"], blk["cb1"] = linear(bottleneck_param, mixer_channel_dim)
        blk["cw2"], blk["cb2"] = linear(mixer_channel_dim, bottleneck_param)
        blocks.append(blk)

    params = {}
    params["bw"], params["bb"] = linear(h_proj, bottleneck_param)
    for k in ("ln1_g", "ln1_b", "tw1", "tb1", "tw2", "tb2",
              "ln2_g", "ln2_b", "cw1", "cb1", "cw2", "cb2"):
        params[k] = jnp.stack([blk[k] for blk in blocks], axis=0)
    params["hln_g"] = jnp.ones((bottleneck_param,), jnp.float32)
    params["hln_b"] = jnp.zeros((bottleneck_param,), jnp.float32)
    params["hw"], params["hb"] = linear(bottleneck_param, nb_classes)

    x = jax.random.normal(next(keys), (B, sentence_length, h_proj), jnp.float32)

    out = nlp_mixer_forward(x, params, nb_classes)
    out = jax.block_until_ready(out)

    ref = reference_forward(x, params, nb_classes)
    assert out.shape == ref.shape, (out.shape, ref.shape)
    # Kernel uses bf16 MXU operands (f32 accumulation) and tanh GELU; the
    # reference is exact-GELU f32 HIGHEST, so allow a modest tolerance.
    assert jnp.allclose(out, ref, atol=2e-2, rtol=2e-2), (
        float(jnp.max(jnp.abs(out - ref))))

    print("KERNEL_OK")
</pallas_src>

<mosaic_0001>
module attributes {stable_mosaic.version = 11 : i64} {
  func.func @fused_mixer_kernel(%arg0: memref<2x8x96xf32, #tpu.memory_space<vmem>>, %arg1: memref<128x32xbf16, #tpu.memory_space<vmem>>, %arg2: memref<2x4x32x32xbf16, #tpu.memory_space<vmem>>, %arg3: memref<16x32xf32, #tpu.memory_space<vmem>>, %arg4: memref<2x40x1xf32, #tpu.memory_space<vmem>>, %arg5: memref<2x1xf32, #tpu.memory_space<vmem>>) attributes {dimension_semantics = [], scalar_prefetch = 0 : i64, scratch_operands = 0 : i64, tpu.core_type = #tpu.core_type<tc>} {
    %c0 = arith.constant 0 : index
    %c0_0 = arith.constant 0 : index
    %0 = vector.load %arg1[%c0, %c0_0] : memref<128x32xbf16, #tpu.memory_space<vmem>>, vector<128x32xbf16>
    %c0_1 = arith.constant 0 : index
    %c0_2 = arith.constant 0 : index
    %c0_3 = arith.constant 0 : index
    %c0_4 = arith.constant 0 : index
    %1 = vector.load %arg2[%c0_1, %c0_2, %c0_3, %c0_4] : memref<2x4x32x32xbf16, #tpu.memory_space<vmem>>, vector<2x4x32x32xbf16>
    %c0_5 = arith.constant 0 : index
    %c0_6 = arith.constant 0 : index
    %2 = vector.load %arg3[%c0_5, %c0_6] : memref<16x32xf32, #tpu.memory_space<vmem>>, vector<16x32xf32>
    %c0_7 = arith.constant 0 : index
    %c0_8 = arith.constant 0 : index
    %c0_9 = arith.constant 0 : index
    %3 = vector.load %arg4[%c0_7, %c0_8, %c0_9] : memref<2x40x1xf32, #tpu.memory_space<vmem>>, vector<2x40x1xf32>
    %c0_10 = arith.constant 0 : index
    %c0_11 = arith.constant 0 : index
    %c0_12 = arith.constant 0 : index
    %4 = vector.load %arg0[%c0_10, %c0_11, %c0_12] : memref<2x8x96xf32, #tpu.memory_space<vmem>>, vector<2x8x96xf32>
    %5 = vector.shape_cast %4 : vector<2x8x96xf32> to vector<16x96xf32>
    %6 = arith.truncf %5 : vector<16x96xf32> to vector<16x96xbf16>
    %7 = vector.extract_strided_slice %0 {offsets = [0, 0], sizes = [96, 32], strides = [1, 1]} : vector<128x32xbf16> to vector<96x32xbf16>
    %8 = vector.extract_strided_slice %2 {offsets = [0, 0], sizes = [1, 32], strides = [1, 1]} : vector<16x32xf32> to vector<1x32xf32>
    %cst = arith.constant dense<0.000000e+00> : vector<16x32xf32>
    %9 = tpu.matmul %6, %7, %cst {dimension_numbers = #tpu.dot_dimension_numbers<[1], [0], [0], [1], [0, 0, 1, 1], [], []>} : vector<16x96xbf16>, vector<96x32xbf16>, vector<16x32xf32> -> vector<16x32xf32>
    %10 = vector.broadcast %8 : vector<1x32xf32> to vector<16x32xf32>
    %11 = arith.addf %9, %10 : vector<16x32xf32>
    %12 = vector.extract_strided_slice %2 {offsets = [1, 0], sizes = [1, 32], strides = [1, 1]} : vector<16x32xf32> to vector<1x32xf32>
    %13 = vector.extract_strided_slice %2 {offsets = [2, 0], sizes = [1, 32], strides = [1, 1]} : vector<16x32xf32> to vector<1x32xf32>
    %14 = vector.extract_strided_slice %2 {offsets = [3, 0], sizes = [1, 32], strides = [1, 1]} : vector<16x32xf32> to vector<1x32xf32>
    %15 = vector.extract_strided_slice %2 {offsets = [4, 0], sizes = [1, 32], strides = [1, 1]} : vector<16x32xf32> to vector<1x32xf32>
    %16 = vector.extract_strided_slice %2 {offsets = [5, 0], sizes = [1, 32], strides = [1, 1]} : vector<16x32xf32> to vector<1x32xf32>
    %17 = vector.extract_strided_slice %2 {offsets = [6, 0], sizes = [1, 32], strides = [1, 1]} : vector<16x32xf32> to vector<1x32xf32>
    %18 = vector.extract_strided_slice %1 {offsets = [0, 0, 0, 0], sizes = [1, 4, 32, 32], strides = [1, 1, 1, 1]} : vector<2x4x32x32xbf16> to vector<1x4x32x32xbf16>
    %19 = vector.shape_cast %18 : vector<1x4x32x32xbf16> to vector<4x32x32xbf16>
    %20 = vector.extract_strided_slice %19 {offsets = [0, 0, 0], sizes = [1, 32, 8], strides = [1, 1, 1]} : vector<4x32x32xbf16> to vector<1x32x8xbf16>
    %21 = vector.shape_cast %20 : vector<1x32x8xbf16> to vector<32x8xbf16>
    %22 = vector.extract_strided_slice %19 {offsets = [1, 0, 0], sizes = [1, 8, 32], strides = [1, 1, 1]} : vector<4x32x32xbf16> to vector<1x8x32xbf16>
    %23 = vector.shape_cast %22 : vector<1x8x32xbf16> to vector<8x32xbf16>
    %24 = vector.extract_strided_slice %19 {offsets = [2, 0, 0], sizes = [1, 32, 32], strides = [1, 1, 1]} : vector<4x32x32xbf16> to vector<1x32x32xbf16>
    %25 = vector.shape_cast %24 : vector<1x32x32xbf16> to vector<32x32xbf16>
    %26 = vector.extract_strided_slice %19 {offsets = [3, 0, 0], sizes = [1, 32, 32], strides = [1, 1, 1]} : vector<4x32x32xbf16> to vector<1x32x32xbf16>
    %27 = vector.shape_cast %26 : vector<1x32x32xbf16> to vector<32x32xbf16>
    %28 = vector.extract_strided_slice %3 {offsets = [0, 0, 0], sizes = [1, 32, 1], strides = [1, 1, 1]} : vector<2x40x1xf32> to vector<1x32x1xf32>
    %29 = vector.shape_cast %28 : vector<1x32x1xf32> to vector<32x1xf32>
    %30 = vector.extract_strided_slice %3 {offsets = [0, 32, 0], sizes = [1, 8, 1], strides = [1, 1, 1]} : vector<2x40x1xf32> to vector<1x8x1xf32>
    %31 = vector.shape_cast %30 : vector<1x8x1xf32> to vector<8x1xf32>
    %cst_13 = arith.constant dense<0.000000e+00> : vector<16xf32>
    %32 = vector.multi_reduction <add>, %11, %cst_13 [1] : vector<16x32xf32> to vector<16xf32>
    %33 = vector.shape_cast %32 : vector<16xf32> to vector<16x1xf32>
    %cst_14 = arith.constant 3.200000e+01 : f32
    %34 = vector.broadcast %cst_14 : f32 to vector<16x1xf32>
    %35 = arith.divf %33, %34 : vector<16x1xf32>
    %36 = arith.mulf %11, %11 : vector<16x32xf32>
    %cst_15 = arith.constant dense<0.000000e+00> : vector<16xf32>
    %37 = vector.multi_reduction <add>, %36, %cst_15 [1] : vector<16x32xf32> to vector<16xf32>
    %38 = vector.shape_cast %37 : vector<16xf32> to vector<16x1xf32>
    %cst_16 = arith.constant 3.200000e+01 : f32
    %39 = vector.broadcast %cst_16 : f32 to vector<16x1xf32>
    %40 = arith.divf %38, %39 : vector<16x1xf32>
    %41 = arith.mulf %35, %35 : vector<16x1xf32>
    %42 = arith.subf %40, %41 : vector<16x1xf32>
    %43 = vector.broadcast %35 : vector<16x1xf32> to vector<16x32xf32>
    %44 = arith.subf %11, %43 : vector<16x32xf32>
    %cst_17 = arith.constant 9.99999974E-6 : f32
    %45 = vector.broadcast %cst_17 : f32 to vector<16x1xf32>
    %46 = arith.addf %42, %45 : vector<16x1xf32>
    %47 = math.rsqrt %46 : vector<16x1xf32>
    %48 = vector.broadcast %47 : vector<16x1xf32> to vector<16x32xf32>
    %49 = arith.mulf %44, %48 : vector<16x32xf32>
    %50 = vector.broadcast %12 : vector<1x32xf32> to vector<16x32xf32>
    %51 = arith.mulf %49, %50 : vector<16x32xf32>
    %52 = vector.broadcast %13 : vector<1x32xf32> to vector<16x32xf32>
    %53 = arith.addf %51, %52 : vector<16x32xf32>
    %54 = arith.truncf %53 : vector<16x32xf32> to vector<16x32xbf16>
    %55 = vector.extract_strided_slice %54 {offsets = [0, 0], sizes = [8, 32], strides = [1, 1]} : vector<16x32xbf16> to vector<8x32xbf16>
    %cst_18 = arith.constant dense<0.000000e+00> : vector<32x32xf32>
    %56 = tpu.matmul %21, %55, %cst_18 {dimension_numbers = #tpu.dot_dimension_numbers<[1], [0], [0], [1], [0, 0, 1, 1], [], []>} : vector<32x8xbf16>, vector<8x32xbf16>, vector<32x32xf32> -> vector<32x32xf32>
    %57 = vector.broadcast %29 : vector<32x1xf32> to vector<32x32xf32>
    %58 = arith.addf %56, %57 : vector<32x32xf32>
    %59 = arith.mulf %58, %58 : vector<32x32xf32>
    %60 = arith.mulf %58, %59 : vector<32x32xf32>
    %cst_19 = arith.constant 4.471500e-02 : f32
    %61 = vector.broadcast %cst_19 : f32 to vector<32x32xf32>
    %62 = arith.mulf %61, %60 : vector<32x32xf32>
    %63 = arith.addf %58, %62 : vector<32x32xf32>
    %cst_20 = arith.constant 0.797884583 : f32
    %64 = vector.broadcast %cst_20 : f32 to vector<32x32xf32>
    %65 = arith.mulf %64, %63 : vector<32x32xf32>
    %66 = math.tanh %65 : vector<32x32xf32>
    %cst_21 = arith.constant 1.000000e+00 : f32
    %67 = vector.broadcast %cst_21 : f32 to vector<32x32xf32>
    %68 = arith.addf %67, %66 : vector<32x32xf32>
    %cst_22 = arith.constant 5.000000e-01 : f32
    %69 = vector.broadcast %cst_22 : f32 to vector<32x32xf32>
    %70 = arith.mulf %69, %68 : vector<32x32xf32>
    %71 = arith.mulf %58, %70 : vector<32x32xf32>
    %72 = arith.truncf %71 : vector<32x32xf32> to vector<32x32xbf16>
    %cst_23 = arith.constant dense<0.000000e+00> : vector<8x32xf32>
    %73 = tpu.matmul %23, %72, %cst_23 {dimension_numbers = #tpu.dot_dimension_numbers<[1], [0], [0], [1], [0, 0, 1, 1], [], []>} : vector<8x32xbf16>, vector<32x32xbf16>, vector<8x32xf32> -> vector<8x32xf32>
    %74 = vector.broadcast %31 : vector<8x1xf32> to vector<8x32xf32>
    %75 = arith.addf %73, %74 : vector<8x32xf32>
    %76 = vector.extract_strided_slice %54 {offsets = [8, 0], sizes = [8, 32], strides = [1, 1]} : vector<16x32xbf16> to vector<8x32xbf16>
    %cst_24 = arith.constant dense<0.000000e+00> : vector<32x32xf32>
    %77 = tpu.matmul %21, %76, %cst_24 {dimension_numbers = #tpu.dot_dimension_numbers<[1], [0], [0], [1], [0, 0, 1, 1], [], []>} : vector<32x8xbf16>, vector<8x32xbf16>, vector<32x32xf32> -> vector<32x32xf32>
    %78 = vector.broadcast %29 : vector<32x1xf32> to vector<32x32xf32>
    %79 = arith.addf %77, %78 : vector<32x32xf32>
    %80 = arith.mulf %79, %79 : vector<32x32xf32>
    %81 = arith.mulf %79, %80 : vector<32x32xf32>
    %cst_25 = arith.constant 4.471500e-02 : f32
    %82 = vector.broadcast %cst_25 : f32 to vector<32x32xf32>
    %83 = arith.mulf %82, %81 : vector<32x32xf32>
    %84 = arith.addf %79, %83 : vector<32x32xf32>
    %cst_26 = arith.constant 0.797884583 : f32
    %85 = vector.broadcast %cst_26 : f32 to vector<32x32xf32>
    %86 = arith.mulf %85, %84 : vector<32x32xf32>
    %87 = math.tanh %86 : vector<32x32xf32>
    %cst_27 = arith.constant 1.000000e+00 : f32
    %88 = vector.broadcast %cst_27 : f32 to vector<32x32xf32>
    %89 = arith.addf %88, %87 : vector<32x32xf32>
    %cst_28 = arith.constant 5.000000e-01 : f32
    %90 = vector.broadcast %cst_28 : f32 to vector<32x32xf32>
    %91 = arith.mulf %90, %89 : vector<32x32xf32>
    %92 = arith.mulf %79, %91 : vector<32x32xf32>
    %93 = arith.truncf %92 : vector<32x32xf32> to vector<32x32xbf16>
    %cst_29 = arith.constant dense<0.000000e+00> : vector<8x32xf32>
    %94 = tpu.matmul %23, %93, %cst_29 {dimension_numbers = #tpu.dot_dimension_numbers<[1], [0], [0], [1], [0, 0, 1, 1], [], []>} : vector<8x32xbf16>, vector<32x32xbf16>, vector<8x32xf32> -> vector<8x32xf32>
    %95 = vector.broadcast %31 : vector<8x1xf32> to vector<8x32xf32>
    %96 = arith.addf %94, %95 : vector<8x32xf32>
    %97 = tpu.concatenate %75, %96 in 0 : vector<8x32xf32>, vector<8x32xf32> -> vector<16x32xf32>
    %98 = arith.addf %11, %97 : vector<16x32xf32>
    %cst_30 = arith.constant dense<0.000000e+00> : vector<16xf32>
    %99 = vector.multi_reduction <add>, %98, %cst_30 [1] : vector<16x32xf32> to vector<16xf32>
    %100 = vector.shape_cast %99 : vector<16xf32> to vector<16x1xf32>
    %cst_31 = arith.constant 3.200000e+01 : f32
    %101 = vector.broadcast %cst_31 : f32 to vector<16x1xf32>
    %102 = arith.divf %100, %101 : vector<16x1xf32>
    %103 = arith.mulf %98, %98 : vector<16x32xf32>
    %cst_32 = arith.constant dense<0.000000e+00> : vector<16xf32>
    %104 = vector.multi_reduction <add>, %103, %cst_32 [1] : vector<16x32xf32> to vector<16xf32>
    %105 = vector.shape_cast %104 : vector<16xf32> to vector<16x1xf32>
    %cst_33 = arith.constant 3.200000e+01 : f32
    %106 = vector.broadcast %cst_33 : f32 to vector<16x1xf32>
    %107 = arith.divf %105, %106 : vector<16x1xf32>
    %108 = arith.mulf %102, %102 : vector<16x1xf32>
    %109 = arith.subf %107, %108 : vector<16x1xf32>
    %110 = vector.broadcast %102 : vector<16x1xf32> to vector<16x32xf32>
    %111 = arith.subf %98, %110 : vector<16x32xf32>
    %cst_34 = arith.constant 9.99999974E-6 : f32
    %112 = vector.broadcast %cst_34 : f32 to vector<16x1xf32>
    %113 = arith.addf %109, %112 : vector<16x1xf32>
    %114 = math.rsqrt %113 : vector<16x1xf32>
    %115 = vector.broadcast %114 : vector<16x1xf32> to vector<16x32xf32>
    %116 = arith.mulf %111, %115 : vector<16x32xf32>
    %117 = vector.broadcast %14 : vector<1x32xf32> to vector<16x32xf32>
    %118 = arith.mulf %116, %117 : vector<16x32xf32>
    %119 = vector.broadcast %15 : vector<1x32xf32> to vector<16x32xf32>
    %120 = arith.addf %118, %119 : vector<16x32xf32>
    %121 = arith.truncf %120 : vector<16x32xf32> to vector<16x32xbf16>
    %cst_35 = arith.constant dense<0.000000e+00> : vector<16x32xf32>
    %122 = tpu.matmul %121, %25, %cst_35 {dimension_numbers = #tpu.dot_dimension_numbers<[1], [0], [0], [1], [0, 0, 1, 1], [], []>} : vector<16x32xbf16>, vector<32x32xbf16>, vector<16x32xf32> -> vector<16x32xf32>
    %123 = vector.broadcast %16 : vector<1x32xf32> to vector<16x32xf32>
    %124 = arith.addf %122, %123 : vector<16x32xf32>
    %125 = arith.mulf %124, %124 : vector<16x32xf32>
    %126 = arith.mulf %124, %125 : vector<16x32xf32>
    %cst_36 = arith.constant 4.471500e-02 : f32
    %127 = vector.broadcast %cst_36 : f32 to vector<16x32xf32>
    %128 = arith.mulf %127, %126 : vector<16x32xf32>
    %129 = arith.addf %124, %128 : vector<16x32xf32>
    %cst_37 = arith.constant 0.797884583 : f32
    %130 = vector.broadcast %cst_37 : f32 to vector<16x32xf32>
    %131 = arith.mulf %130, %129 : vector<16x32xf32>
    %132 = math.tanh %131 : vector<16x32xf32>
    %cst_38 = arith.constant 1.000000e+00 : f32
    %133 = vector.broadcast %cst_38 : f32 to vector<16x32xf32>
    %134 = arith.addf %133, %132 : vector<16x32xf32>
    %cst_39 = arith.constant 5.000000e-01 : f32
    %135 = vector.broadcast %cst_39 : f32 to vector<16x32xf32>
    %136 = arith.mulf %135, %134 : vector<16x32xf32>
    %137 = arith.mulf %124, %136 : vector<16x32xf32>
    %138 = arith.truncf %137 : vector<16x32xf32> to vector<16x32xbf16>
    %cst_40 = arith.constant dense<0.000000e+00> : vector<16x32xf32>
    %139 = tpu.matmul %138, %27, %cst_40 {dimension_numbers = #tpu.dot_dimension_numbers<[1], [0], [0], [1], [0, 0, 1, 1], [], []>} : vector<16x32xbf16>, vector<32x32xbf16>, vector<16x32xf32> -> vector<16x32xf32>
    %140 = arith.addf %98, %139 : vector<16x32xf32>
    %141 = vector.broadcast %17 : vector<1x32xf32> to vector<16x32xf32>
    %142 = arith.addf %140, %141 : vector<16x32xf32>
    %143 = vector.extract_strided_slice %2 {offsets = [7, 0], sizes = [1, 32], strides = [1, 1]} : vector<16x32xf32> to vector<1x32xf32>
    %144 = vector.extract_strided_slice %2 {offsets = [8, 0], sizes = [1, 32], strides = [1, 1]} : vector<16x32xf32> to vector<1x32xf32>
    %145 = vector.extract_strided_slice %2 {offsets = [9, 0], sizes = [1, 32], strides = [1, 1]} : vector<16x32xf32> to vector<1x32xf32>
    %146 = vector.extract_strided_slice %2 {offsets = [10, 0], sizes = [1, 32], strides = [1, 1]} : vector<16x32xf32> to vector<1x32xf32>
    %147 = vector.extract_strided_slice %2 {offsets = [11, 0], sizes = [1, 32], strides = [1, 1]} : vector<16x32xf32> to vector<1x32xf32>
    %148 = vector.extract_strided_slice %2 {offsets = [12, 0], sizes = [1, 32], strides = [1, 1]} : vector<16x32xf32> to vector<1x32xf32>
    %149 = vector.extract_strided_slice %1 {offsets = [1, 0, 0, 0], sizes = [1, 4, 32, 32], strides = [1, 1, 1, 1]} : vector<2x4x32x32xbf16> to vector<1x4x32x32xbf16>
    %150 = vector.shape_cast %149 : vector<1x4x32x32xbf16> to vector<4x32x32xbf16>
    %151 = vector.extract_strided_slice %150 {offsets = [0, 0, 0], sizes = [1, 32, 8], strides = [1, 1, 1]} : vector<4x32x32xbf16> to vector<1x32x8xbf16>
    %152 = vector.shape_cast %151 : vector<1x32x8xbf16> to vector<32x8xbf16>
    %153 = vector.extract_strided_slice %150 {offsets = [1, 0, 0], sizes = [1, 8, 32], strides = [1, 1, 1]} : vector<4x32x32xbf16> to vector<1x8x32xbf16>
    %154 = vector.shape_cast %153 : vector<1x8x32xbf16> to vector<8x32xbf16>
    %155 = vector.extract_strided_slice %150 {offsets = [2, 0, 0], sizes = [1, 32, 32], strides = [1, 1, 1]} : vector<4x32x32xbf16> to vector<1x32x32xbf16>
    %156 = vector.shape_cast %155 : vector<1x32x32xbf16> to vector<32x32xbf16>
    %157 = vector.extract_strided_slice %150 {offsets = [3, 0, 0], sizes = [1, 32, 32], strides = [1, 1, 1]} : vector<4x32x32xbf16> to vector<1x32x32xbf16>
    %158 = vector.shape_cast %157 : vector<1x32x32xbf16> to vector<32x32xbf16>
    %159 = vector.extract_strided_slice %3 {offsets = [1, 0, 0], sizes = [1, 32, 1], strides = [1, 1, 1]} : vector<2x40x1xf32> to vector<1x32x1xf32>
    %160 = vector.shape_cast %159 : vector<1x32x1xf32> to vector<32x1xf32>
    %161 = vector.extract_strided_slice %3 {offsets = [1, 32, 0], sizes = [1, 8, 1], strides = [1, 1, 1]} : vector<2x40x1xf32> to vector<1x8x1xf32>
    %162 = vector.shape_cast %161 : vector<1x8x1xf32> to vector<8x1xf32>
    %cst_41 = arith.constant dense<0.000000e+00> : vector<16xf32>
    %163 = vector.multi_reduction <add>, %142, %cst_41 [1] : vector<16x32xf32> to vector<16xf32>
    %164 = vector.shape_cast %163 : vector<16xf32> to vector<16x1xf32>
    %cst_42 = arith.constant 3.200000e+01 : f32
    %165 = vector.broadcast %cst_42 : f32 to vector<16x1xf32>
    %166 = arith.divf %164, %165 : vector<16x1xf32>
    %167 = arith.mulf %142, %142 : vector<16x32xf32>
    %cst_43 = arith.constant dense<0.000000e+00> : vector<16xf32>
    %168 = vector.multi_reduction <add>, %167, %cst_43 [1] : vector<16x32xf32> to vector<16xf32>
    %169 = vector.shape_cast %168 : vector<16xf32> to vector<16x1xf32>
    %cst_44 = arith.constant 3.200000e+01 : f32
    %170 = vector.broadcast %cst_44 : f32 to vector<16x1xf32>
    %171 = arith.divf %169, %170 : vector<16x1xf32>
    %172 = arith.mulf %166, %166 : vector<16x1xf32>
    %173 = arith.subf %171, %172 : vector<16x1xf32>
    %174 = vector.broadcast %166 : vector<16x1xf32> to vector<16x32xf32>
    %175 = arith.subf %142, %174 : vector<16x32xf32>
    %cst_45 = arith.constant 9.99999974E-6 : f32
    %176 = vector.broadcast %cst_45 : f32 to vector<16x1xf32>
    %177 = arith.addf %173, %176 : vector<16x1xf32>
    %178 = math.rsqrt %177 : vector<16x1xf32>
    %179 = vector.broadcast %178 : vector<16x1xf32> to vector<16x32xf32>
    %180 = arith.mulf %175, %179 : vector<16x32xf32>
    %181 = vector.broadcast %143 : vector<1x32xf32> to vector<16x32xf32>
    %182 = arith.mulf %180, %181 : vector<16x32xf32>
    %183 = vector.broadcast %144 : vector<1x32xf32> to vector<16x32xf32>
    %184 = arith.addf %182, %183 : vector<16x32xf32>
    %185 = arith.truncf %184 : vector<16x32xf32> to vector<16x32xbf16>
    %186 = vector.extract_strided_slice %185 {offsets = [0, 0], sizes = [8, 32], strides = [1, 1]} : vector<16x32xbf16> to vector<8x32xbf16>
    %cst_46 = arith.constant dense<0.000000e+00> : vector<32x32xf32>
    %187 = tpu.matmul %152, %186, %cst_46 {dimension_numbers = #tpu.dot_dimension_numbers<[1], [0], [0], [1], [0, 0, 1, 1], [], []>} : vector<32x8xbf16>, vector<8x32xbf16>, vector<32x32xf32> -> vector<32x32xf32>
    %188 = vector.broadcast %160 : vector<32x1xf32> to vector<32x32xf32>
    %189 = arith.addf %187, %188 : vector<32x32xf32>
    %190 = arith.mulf %189, %189 : vector<32x32xf32>
    %191 = arith.mulf %189, %190 : vector<32x32xf32>
    %cst_47 = arith.constant 4.471500e-02 : f32
    %192 = vector.broadcast %cst_47 : f32 to vector<32x32xf32>
    %193 = arith.mulf %192, %191 : vector<32x32xf32>
    %194 = arith.addf %189, %193 : vector<32x32xf32>
    %cst_48 = arith.constant 0.797884583 : f32
    %195 = vector.broadcast %cst_48 : f32 to vector<32x32xf32>
    %196 = arith.mulf %195, %194 : vector<32x32xf32>
    %197 = math.tanh %196 : vector<32x32xf32>
    %cst_49 = arith.constant 1.000000e+00 : f32
    %198 = vector.broadcast %cst_49 : f32 to vector<32x32xf32>
    %199 = arith.addf %198, %197 : vector<32x32xf32>
    %cst_50 = arith.constant 5.000000e-01 : f32
    %200 = vector.broadcast %cst_50 : f32 to vector<32x32xf32>
    %201 = arith.mulf %200, %199 : vector<32x32xf32>
    %202 = arith.mulf %189, %201 : vector<32x32xf32>
    %203 = arith.truncf %202 : vector<32x32xf32> to vector<32x32xbf16>
    %cst_51 = arith.constant dense<0.000000e+00> : vector<8x32xf32>
    %204 = tpu.matmul %154, %203, %cst_51 {dimension_numbers = #tpu.dot_dimension_numbers<[1], [0], [0], [1], [0, 0, 1, 1], [], []>} : vector<8x32xbf16>, vector<32x32xbf16>, vector<8x32xf32> -> vector<8x32xf32>
    %205 = vector.broadcast %162 : vector<8x1xf32> to vector<8x32xf32>
    %206 = arith.addf %204, %205 : vector<8x32xf32>
    %207 = vector.extract_strided_slice %185 {offsets = [8, 0], sizes = [8, 32], strides = [1, 1]} : vector<16x32xbf16> to vector<8x32xbf16>
    %cst_52 = arith.constant dense<0.000000e+00> : vector<32x32xf32>
    %208 = tpu.matmul %152, %207, %cst_52 {dimension_numbers = #tpu.dot_dimension_numbers<[1], [0], [0], [1], [0, 0, 1, 1], [], []>} : vector<32x8xbf16>, vector<8x32xbf16>, vector<32x32xf32> -> vector<32x32xf32>
    %209 = vector.broadcast %160 : vector<32x1xf32> to vector<32x32xf32>
    %210 = arith.addf %208, %209 : vector<32x32xf32>
    %211 = arith.mulf %210, %210 : vector<32x32xf32>
    %212 = arith.mulf %210, %211 : vector<32x32xf32>
    %cst_53 = arith.constant 4.471500e-02 : f32
    %213 = vector.broadcast %cst_53 : f32 to vector<32x32xf32>
    %214 = arith.mulf %213, %212 : vector<32x32xf32>
    %215 = arith.addf %210, %214 : vector<32x32xf32>
    %cst_54 = arith.constant 0.797884583 : f32
    %216 = vector.broadcast %cst_54 : f32 to vector<32x32xf32>
    %217 = arith.mulf %216, %215 : vector<32x32xf32>
    %218 = math.tanh %217 : vector<32x32xf32>
    %cst_55 = arith.constant 1.000000e+00 : f32
    %219 = vector.broadcast %cst_55 : f32 to vector<32x32xf32>
    %220 = arith.addf %219, %218 : vector<32x32xf32>
    %cst_56 = arith.constant 5.000000e-01 : f32
    %221 = vector.broadcast %cst_56 : f32 to vector<32x32xf32>
    %222 = arith.mulf %221, %220 : vector<32x32xf32>
    %223 = arith.mulf %210, %222 : vector<32x32xf32>
    %224 = arith.truncf %223 : vector<32x32xf32> to vector<32x32xbf16>
    %cst_57 = arith.constant dense<0.000000e+00> : vector<8x32xf32>
    %225 = tpu.matmul %154, %224, %cst_57 {dimension_numbers = #tpu.dot_dimension_numbers<[1], [0], [0], [1], [0, 0, 1, 1], [], []>} : vector<8x32xbf16>, vector<32x32xbf16>, vector<8x32xf32> -> vector<8x32xf32>
    %226 = vector.broadcast %162 : vector<8x1xf32> to vector<8x32xf32>
    %227 = arith.addf %225, %226 : vector<8x32xf32>
    %228 = tpu.concatenate %206, %227 in 0 : vector<8x32xf32>, vector<8x32xf32> -> vector<16x32xf32>
    %229 = arith.addf %142, %228 : vector<16x32xf32>
    %cst_58 = arith.constant dense<0.000000e+00> : vector<16xf32>
    %230 = vector.multi_reduction <add>, %229, %cst_58 [1] : vector<16x32xf32> to vector<16xf32>
    %231 = vector.shape_cast %230 : vector<16xf32> to vector<16x1xf32>
    %cst_59 = arith.constant 3.200000e+01 : f32
    %232 = vector.broadcast %cst_59 : f32 to vector<16x1xf32>
    %233 = arith.divf %231, %232 : vector<16x1xf32>
    %234 = arith.mulf %229, %229 : vector<16x32xf32>
    %cst_60 = arith.constant dense<0.000000e+00> : vector<16xf32>
    %235 = vector.multi_reduction <add>, %234, %cst_60 [1] : vector<16x32xf32> to vector<16xf32>
    %236 = vector.shape_cast %235 : vector<16xf32> to vector<16x1xf32>
    %cst_61 = arith.constant 3.200000e+01 : f32
    %237 = vector.broadcast %cst_61 : f32 to vector<16x1xf32>
    %238 = arith.divf %236, %237 : vector<16x1xf32>
    %239 = arith.mulf %233, %233 : vector<16x1xf32>
    %240 = arith.subf %238, %239 : vector<16x1xf32>
    %241 = vector.broadcast %233 : vector<16x1xf32> to vector<16x32xf32>
    %242 = arith.subf %229, %241 : vector<16x32xf32>
    %cst_62 = arith.constant 9.99999974E-6 : f32
    %243 = vector.broadcast %cst_62 : f32 to vector<16x1xf32>
    %244 = arith.addf %240, %243 : vector<16x1xf32>
    %245 = math.rsqrt %244 : vector<16x1xf32>
    %246 = vector.broadcast %245 : vector<16x1xf32> to vector<16x32xf32>
    %247 = arith.mulf %242, %246 : vector<16x32xf32>
    %248 = vector.broadcast %145 : vector<1x32xf32> to vector<16x32xf32>
    %249 = arith.mulf %247, %248 : vector<16x32xf32>
    %250 = vector.broadcast %146 : vector<1x32xf32> to vector<16x32xf32>
    %251 = arith.addf %249, %250 : vector<16x32xf32>
    %252 = arith.truncf %251 : vector<16x32xf32> to vector<16x32xbf16>
    %cst_63 = arith.constant dense<0.000000e+00> : vector<16x32xf32>
    %253 = tpu.matmul %252, %156, %cst_63 {dimension_numbers = #tpu.dot_dimension_numbers<[1], [0], [0], [1], [0, 0, 1, 1], [], []>} : vector<16x32xbf16>, vector<32x32xbf16>, vector<16x32xf32> -> vector<16x32xf32>
    %254 = vector.broadcast %147 : vector<1x32xf32> to vector<16x32xf32>
    %255 = arith.addf %253, %254 : vector<16x32xf32>
    %256 = arith.mulf %255, %255 : vector<16x32xf32>
    %257 = arith.mulf %255, %256 : vector<16x32xf32>
    %cst_64 = arith.constant 4.471500e-02 : f32
    %258 = vector.broadcast %cst_64 : f32 to vector<16x32xf32>
    %259 = arith.mulf %258, %257 : vector<16x32xf32>
    %260 = arith.addf %255, %259 : vector<16x32xf32>
    %cst_65 = arith.constant 0.797884583 : f32
    %261 = vector.broadcast %cst_65 : f32 to vector<16x32xf32>
    %262 = arith.mulf %261, %260 : vector<16x32xf32>
    %263 = math.tanh %262 : vector<16x32xf32>
    %cst_66 = arith.constant 1.000000e+00 : f32
    %264 = vector.broadcast %cst_66 : f32 to vector<16x32xf32>
    %265 = arith.addf %264, %263 : vector<16x32xf32>
    %cst_67 = arith.constant 5.000000e-01 : f32
    %266 = vector.broadcast %cst_67 : f32 to vector<16x32xf32>
    %267 = arith.mulf %266, %265 : vector<16x32xf32>
    %268 = arith.mulf %255, %267 : vector<16x32xf32>
    %269 = arith.truncf %268 : vector<16x32xf32> to vector<16x32xbf16>
    %cst_68 = arith.constant dense<0.000000e+00> : vector<16x32xf32>
    %270 = tpu.matmul %269, %158, %cst_68 {dimension_numbers = #tpu.dot_dimension_numbers<[1], [0], [0], [1], [0, 0, 1, 1], [], []>} : vector<16x32xbf16>, vector<32x32xbf16>, vector<16x32xf32> -> vector<16x32xf32>
    %271 = arith.addf %229, %270 : vector<16x32xf32>
    %272 = vector.broadcast %148 : vector<1x32xf32> to vector<16x32xf32>
    %273 = arith.addf %271, %272 : vector<16x32xf32>
    %274 = vector.extract_strided_slice %2 {offsets = [13, 0], sizes = [1, 32], strides = [1, 1]} : vector<16x32xf32> to vector<1x32xf32>
    %275 = vector.extract_strided_slice %2 {offsets = [14, 0], sizes = [1, 32], strides = [1, 1]} : vector<16x32xf32> to vector<1x32xf32>
    %276 = vector.extract_strided_slice %2 {offsets = [15, 0], sizes = [1, 1], strides = [1, 1]} : vector<16x32xf32> to vector<1x1xf32>
    %277 = vector.extract_strided_slice %0 {offsets = [96, 0], sizes = [32, 1], strides = [1, 1]} : vector<128x32xbf16> to vector<32x1xbf16>
    %cst_69 = arith.constant dense<0.000000e+00> : vector<16xf32>
    %278 = vector.multi_reduction <add>, %273, %cst_69 [1] : vector<16x32xf32> to vector<16xf32>
    %279 = vector.shape_cast %278 : vector<16xf32> to vector<16x1xf32>
    %cst_70 = arith.constant 3.200000e+01 : f32
    %280 = vector.broadcast %cst_70 : f32 to vector<16x1xf32>
    %281 = arith.divf %279, %280 : vector<16x1xf32>
    %282 = arith.mulf %273, %273 : vector<16x32xf32>
    %cst_71 = arith.constant dense<0.000000e+00> : vector<16xf32>
    %283 = vector.multi_reduction <add>, %282, %cst_71 [1] : vector<16x32xf32> to vector<16xf32>
    %284 = vector.shape_cast %283 : vector<16xf32> to vector<16x1xf32>
    %cst_72 = arith.constant 3.200000e+01 : f32
    %285 = vector.broadcast %cst_72 : f32 to vector<16x1xf32>
    %286 = arith.divf %284, %285 : vector<16x1xf32>
    %287 = arith.mulf %281, %281 : vector<16x1xf32>
    %288 = arith.subf %286, %287 : vector<16x1xf32>
    %289 = vector.broadcast %281 : vector<16x1xf32> to vector<16x32xf32>
    %290 = arith.subf %273, %289 : vector<16x32xf32>
    %cst_73 = arith.constant 9.99999974E-6 : f32
    %291 = vector.broadcast %cst_73 : f32 to vector<16x1xf32>
    %292 = arith.addf %288, %291 : vector<16x1xf32>
    %293 = math.rsqrt %292 : vector<16x1xf32>
    %294 = vector.broadcast %293 : vector<16x1xf32> to vector<16x32xf32>
    %295 = arith.mulf %290, %294 : vector<16x32xf32>
    %296 = vector.broadcast %274 : vector<1x32xf32> to vector<16x32xf32>
    %297 = arith.mulf %295, %296 : vector<16x32xf32>
    %298 = vector.broadcast %275 : vector<1x32xf32> to vector<16x32xf32>
    %299 = arith.addf %297, %298 : vector<16x32xf32>
    %300 = vector.shape_cast %299 : vector<16x32xf32> to vector<2x8x32xf32>
    %cst_74 = arith.constant dense<0.000000e+00> : vector<2x32xf32>
    %301 = vector.multi_reduction <add>, %300, %cst_74 [1] : vector<2x8x32xf32> to vector<2x32xf32>
    %cst_75 = arith.constant 8.000000e+00 : f32
    %302 = vector.broadcast %cst_75 : f32 to vector<2x32xf32>
    %303 = arith.divf %301, %302 : vector<2x32xf32>
    %304 = arith.truncf %303 : vector<2x32xf32> to vector<2x32xbf16>
    %cst_76 = arith.constant dense<0.000000e+00> : vector<2x1xf32>
    %305 = tpu.matmul %304, %277, %cst_76 {dimension_numbers = #tpu.dot_dimension_numbers<[1], [0], [0], [1], [0, 0, 1, 1], [], []>} : vector<2x32xbf16>, vector<32x1xbf16>, vector<2x1xf32> -> vector<2x1xf32>
    %306 = vector.broadcast %276 : vector<1x1xf32> to vector<2x1xf32>
    %307 = arith.addf %305, %306 : vector<2x1xf32>
    %308 = arith.negf %307 : vector<2x1xf32>
    %309 = math.exp %308 : vector<2x1xf32>
    %cst_77 = arith.constant 1.000000e+00 : f32
    %310 = vector.broadcast %cst_77 : f32 to vector<2x1xf32>
    %311 = arith.addf %310, %309 : vector<2x1xf32>
    %312 = arith.divf %310, %311 : vector<2x1xf32>
    %c0_78 = arith.constant 0 : index
    %c0_79 = arith.constant 0 : index
    %313 = vector.load %arg5[%c0_78, %c0_79] : memref<2x1xf32, #tpu.memory_space<vmem>>, vector<2x1xf32>
    tpu.vector_store %arg5[%c0_78, %c0_79], %312 {strides = array<i32>} : memref<2x1xf32, #tpu.memory_space<vmem>>, vector<2x1xf32>,
    return
  }
}

</mosaic_0001>

<llo_original>
// kernel: tpu_custom_call.1
$region0: #{tpu_custom_call.1}
  #allocation0 [shape = 'u32[]', space=smem, size = 0x4, offset = 0x4, fixed_abs, tag = 'smem constant byte address 0x4 - core index']
  #allocation1 [shape = 'u32[144,128]{1,0:T(1,128)}', space=vmem, size = 0x12000, scoped, tag = 'internal scratch']
  %s0 = inlined_call_operand.vmem [shape: f32[2,8,96], index: 0, kind: input, shape index: {}]
  %s1 = inlined_call_operand.vmem [shape: bf16[128,32], index: 1, kind: input, shape index: {}]
  %s2 = inlined_call_operand.vmem [shape: bf16[2,4,32,32], index: 2, kind: input, shape index: {}]
  %s3 = inlined_call_operand.vmem [shape: f32[16,32], index: 3, kind: input, shape index: {}]
  %s4 = inlined_call_operand.vmem [shape: f32[2,40,1], index: 4, kind: input, shape index: {}]
  %s5 = inlined_call_operand.vmem [shape: f32[2,1], index: 5, kind: output, shape index: {}]
  %s6 = sld [smem:[#allocation0]]
  $region30: #{tpu_custom_call.1} parent=0
    _
  %s8 = ssub.s32 1, %s6
  %s9 = scalar_select 0, %s8, %s6
  // Predicated region
  $region2: #{tpu_custom_call.1} parent=0 // pred_check
    _
  $region3: #{tpu_custom_call.1} parent=0 // pred_check_branch
    %11 = sbr.rel (0) target = $region5
  $region4: #{tpu_custom_call.1} parent=0 // pred_region
    _
  $region5: #{tpu_custom_call.1} parent=0 // pred_fallthru
    _
  // Predicated region
  $region6: #{tpu_custom_call.1} parent=0 // pred_check
    _
  $region7: #{tpu_custom_call.1} parent=0 // pred_check_branch
    %13 = sbr.rel (0) target = $region9
  $region8: #{tpu_custom_call.1} parent=0 // pred_region
    _
  $region9: #{tpu_custom_call.1} parent=0 // pred_fallthru
    _
  // Predicated region
  $region10: #{tpu_custom_call.1} parent=0 // pred_check
    _
  $region11: #{tpu_custom_call.1} parent=0 // pred_check_branch
    %15 = sbr.rel (0) target = $region13
  $region12: #{tpu_custom_call.1} parent=0 // pred_region
    _
  $region13: #{tpu_custom_call.1} parent=0 // pred_fallthru
    _
  // Predicated region
  $region14: #{tpu_custom_call.1} parent=0 // pred_check
    _
  $region15: #{tpu_custom_call.1} parent=0 // pred_check_branch
    %17 = sbr.rel (0) target = $region17
  $region16: #{tpu_custom_call.1} parent=0 // pred_region
    _
  $region17: #{tpu_custom_call.1} parent=0 // pred_fallthru
    _
  // Predicated region
  $region18: #{tpu_custom_call.1} parent=0 // pred_check
    _
  $region19: #{tpu_custom_call.1} parent=0 // pred_check_branch
    %19 = sbr.rel (0) target = $region21
  $region20: #{tpu_custom_call.1} parent=0 // pred_region
    _
  $region21: #{tpu_custom_call.1} parent=0 // pred_fallthru
    _
  %v21 = vld [vmem:[%s1] sm:$0xf]
  %v22 = vld [vmem:[%s1 + $0x4] sm:$0xf]
  %v23 = vld [vmem:[%s1 + $0x8] sm:$0xf]
  %v24 = vld [vmem:[%s1 + $0xc] sm:$0xf]
  %v25 = vld [vmem:[%s1 + $0x10] sm:$0xf]
  %v26 = vld [vmem:[%s1 + $0x14] sm:$0xf]
  %v27 = vld [vmem:[%s1 + $0x18] sm:$0xf]
  %v28 = vld [vmem:[%s1 + $0x1c] sm:$0xf]
  %v29 = vld [vmem:[%s1 + $0x20] sm:$0xf]
  %v30 = vld [vmem:[%s1 + $0x24] sm:$0xf]
  %v31 = vld [vmem:[%s1 + $0x28] sm:$0xf]
  %v32 = vld [vmem:[%s1 + $0x2c] sm:$0xf]
  %v33 = vld [vmem:[%s1 + $0x30] sm:$0xf]
  %v34 = vld [vmem:[%s1 + $0x34] sm:$0xf]
  %v35 = vld [vmem:[%s1 + $0x38] sm:$0xf]
  %v36 = vld [vmem:[%s1 + $0x3c] sm:$0xf]
  %v37 = vld [vmem:[%s2] sm:$0xf]
  %v38 = vld [vmem:[%s2 + $0x4] sm:$0xf]
  %v39 = vld [vmem:[%s2 + $0x8] sm:$0xf]
  %v40 = vld [vmem:[%s2 + $0xc] sm:$0xf]
  %v41 = vld [vmem:[%s2 + $0x10] sm:$0xf]
  %v42 = vld [vmem:[%s2 + $0x20] sm:$0xf]
  %v43 = vld [vmem:[%s2 + $0x24] sm:$0xf]
  %v44 = vld [vmem:[%s2 + $0x28] sm:$0xf]
  %v45 = vld [vmem:[%s2 + $0x2c] sm:$0xf]
  %v46 = vld [vmem:[%s2 + $0x30] sm:$0xf]
  %v47 = vld [vmem:[%s2 + $0x34] sm:$0xf]
  %v48 = vld [vmem:[%s2 + $0x38] sm:$0xf]
  %v49 = vld [vmem:[%s2 + $0x3c] sm:$0xf]
  %v50 = vld [vmem:[%s2 + $0x40] sm:$0xf]
  %v51 = vld [vmem:[%s2 + $0x44] sm:$0xf]
  %v52 = vld [vmem:[%s2 + $0x48] sm:$0xf]
  %v53 = vld [vmem:[%s2 + $0x4c] sm:$0xf]
  %v54 = vld [vmem:[%s2 + $0x50] sm:$0xf]
  %v55 = vld [vmem:[%s2 + $0x60] sm:$0xf]
  %v56 = vld [vmem:[%s2 + $0x64] sm:$0xf]
  %v57 = vld [vmem:[%s2 + $0x68] sm:$0xf]
  %v58 = vld [vmem:[%s2 + $0x6c] sm:$0xf]
  %v59 = vld [vmem:[%s2 + $0x70] sm:$0xf]
  %v60 = vld [vmem:[%s2 + $0x74] sm:$0xf]
  %v61 = vld [vmem:[%s2 + $0x78] sm:$0xf]
  %v62 = vld [vmem:[%s2 + $0x7c] sm:$0xf]
  %v63 = vld [vmem:[%s3] sm:$0xff]
  %v64 = vld [vmem:[%s3 + $0x8] sm:$0xff]
  %v65 = vld [vmem:[%s4] sm:$0xff]
  %v66 = vld [vmem:[%s4 + $0x8] sm:$0xff]
  %v67 = vld [vmem:[%s4 + $0x10] sm:$0xff]
  %v68 = vld [vmem:[%s4 + $0x18] sm:$0xff]
  %v69 = vld [vmem:[%s4 + $0x20] sm:$0xff]
  %v70 = vld [vmem:[%s4 + $0x28] sm:$0xff]
  %v71 = vld [vmem:[%s4 + $0x30] sm:$0xff]
  %v72 = vld [vmem:[%s4 + $0x38] sm:$0xff]
  %v73 = vld [vmem:[%s4 + $0x40] sm:$0xff]
  %v74 = vld [vmem:[%s4 + $0x48] sm:$0xff]
  %v75 = vld [vmem:[%s0] sm:$0xff]
  %v76 = vld [vmem:[%s0 + $0x8] sm:$0xff]
  %v77 = vpack.c.bf16 %v76, %v75
  %v78 = vlaneseq
  %v79 = vshrl.u32 %v78, 7
  %v80 = vsub.s32 0, %v79
  %v81 = vrot.slane %v63, %v80
  %v94 = vunpack.c.l.b16 %v21
  %v95 = vunpack.c.l.b16 %v22
  %v96 = vunpack.c.l.b16 %v23
  %v97 = vunpack.c.l.b16 %v24
  %v98 = vunpack.c.l.b16 %v25
  %v99 = vunpack.c.l.b16 %v26
  %v100 = vunpack.c.l.b16 %v27
  %v101 = vunpack.c.l.b16 %v28
  %v102 = vunpack.c.l.b16 %v29
  %v103 = vunpack.c.l.b16 %v30
  %v104 = vunpack.c.l.b16 %v31
  %v105 = vunpack.c.l.b16 %v32
  %v106 = vpack.c.b16 %v95, %v94
  %v107 = vpack.c.b16 %v97, %v96
  %v108 = vpack.c.b16 %v99, %v98
  %v109 = vpack.c.b16 %v101, %v100
  %v110 = vpack.c.b16 %v103, %v102
  %v111 = vpack.c.b16 %v105, %v104
  %vm118 = vcmask 785408
  %v120 = vsel %vm118, %v77, 0
  %122 = vmatprep.subr.bf16.mxu0 0
  %123 = vmatpush1.bf16.msra.mxu0 0
  %124 = vmatprep.subr.bf16.mxu0 0
  %125 = vmatpush1.bf16.msra.mxu0 0
  %126 = vmatprep.subr.bf16.mxu0 0
  %127 = vmatpush1.bf16.msra.mxu0 %v111
  %128 = vmatprep.subr.bf16.mxu0 0
  %129 = vmatpush1.bf16.msra.mxu0 %v110
  %130 = vmatprep.subr.bf16.mxu0 0
  %131 = vmatpush1.bf16.msra.mxu0 %v109
  %132 = vmatprep.subr.bf16.mxu0 0
  %133 = vmatpush1.bf16.msra.mxu0 %v108
  %134 = vmatprep.subr.bf16.mxu0 0
  %135 = vmatpush1.bf16.msra.mxu0 %v107
  %136 = vmatprep.subr.bf16.mxu0 0
  %137 = vmatpush1.bf16.msra.mxu0 %v106
  %138 = vmatprep.subr.bf16.mxu0 0
  %139 = vmatpush2.bf16.msra.mxu0 0
  %140 = vmatprep.subr.bf16.mxu0 0
  %141 = vmatpush2.bf16.msra.mxu0 0
  %142 = vmatprep.subr.bf16.mxu0 0
  %143 = vmatpush2.bf16.msra.mxu0 0
  %144 = vmatprep.subr.bf16.mxu0 0
  %145 = vmatpush2.bf16.msra.mxu0 0
  %146 = vmatprep.subr.bf16.mxu0 0
  %147 = vmatpush2.bf16.msra.mxu0 0
  %148 = vmatprep.subr.bf16.mxu0 0
  %149 = vmatpush2.bf16.msra.mxu0 0
  %150 = vmatprep.subr.bf16.mxu0 0
  %151 = vmatpush2.bf16.msra.mxu0 0
  %152 = vmatprep.subr.bf16.mxu0 0
  %153 = vmatpush2.bf16.msra.mxu0 0
  %154 = vmatprep.mubr.bf16.mxu0 0
  %155 = vmatmul.mubr.bf16.gmra.mxu0 %v120
  %v156 = vpop.f32.mrf.mxu0
  %v157 = vadd.f32 %v81, %v156
  %v158 = vpop.f32.mrf.mxu0
  %v159 = vpop.f32.mrf.mxu0
  %v160 = vadd.f32 %v81, %v159
  %v161 = vpop.f32.mrf.mxu0
  %162 = vdwg.mxu0
  %vm163 = vcmask 261120
  %v164 = vsel %vm163, %v157, 0.0
  %165 = vadd.xlane.f32.xlu0 %v164
  %v166 = vpop.xlane.xlu0 %165
  %v167 = vsel %vm163, %v160, 0.0
  %168 = vadd.xlane.f32.xlu0 %v167
  %v169 = vpop.xlane.xlu0 %168
  %v170 = vrcp.pop 32.0
  %v171 = vmul.f32 %v166, %v170
  %v172 = vmul.f32 %v169, %v170
  %v173 = vmul.f32 %v157, %v157
  %v174 = vmul.f32 %v160, %v160
  %v175 = vsel %vm163, %v173, 0.0
  %176 = vadd.xlane.f32.xlu0 %v175
  %v177 = vpop.xlane.xlu0 %176
  %v178 = vsel %vm163, %v174, 0.0
  %179 = vadd.xlane.f32.xlu0 %v178
  %v180 = vpop.xlane.xlu0 %179
  %v181 = vmul.f32 %v177, %v170
  %v182 = vmul.f32 %v180, %v170
  %v183 = vmul.f32 %v171, %v171
  %v184 = vmul.f32 %v172, %v172
  %v185 = vsub.f32 %v181, %v183
  %v186 = vsub.f32 %v182, %v184
  %v187 = vsub.f32 %v157, %v171
  %v188 = vsub.f32 %v160, %v172
  %v189 = vadd.f32 %v185, 1e-05
  %v190 = vadd.f32 %v186, 1e-05
  %v191 = vrsqrt.pop %v189
  %v192 = vrsqrt.pop %v190
  %v193 = vmul.f32 %v187, %v191
  %v194 = vmul.f32 %v188, %v192
  %v195 = vlaneseq
  %v196 = vshrl.u32 %v195, 7
  %v197 = vsub.s32 1, %v196
  %v198 = vrot.slane %v63, %v197
  %v199 = vmul.f32 %v193, %v198
  %v200 = vmul.f32 %v194, %v198
  %v201 = vlaneseq
  %v202 = vshrl.u32 %v201, 7
  %v203 = vsub.s32 2, %v202
  %v204 = vrot.slane %v63, %v203
  %v205 = vadd.f32 %v199, %v204
  %v206 = vadd.f32 %v200, %v204
  %v207 = vpack.c.bf16 %v206, %v205
  %209 = vset.pattern.permute.xlu0 0
  %210 = vperm.xlu0 %209, %v65
  %v211 = vpop.permute.xlu0 %210
  %214 = vset.pattern.permute.xlu0 0
  %215 = vperm.xlu0 %214, %v66
  %v216 = vpop.permute.xlu0 %215
  %219 = vset.pattern.permute.xlu0 0
  %220 = vperm.xlu0 %219, %v67
  %v221 = vpop.permute.xlu0 %220
  %224 = vset.pattern.permute.xlu0 0
  %225 = vperm.xlu0 %224, %v68
  %v226 = vpop.permute.xlu0 %225
  %v232 = vunpack.c.l.b16 %v37
  %v233 = vunpack.c.l.b16 %v38
  %v234 = vunpack.c.l.b16 %v39
  %v235 = vunpack.c.l.b16 %v40
  %v236 = vpack.c.b16 %v233, %v232
  %v237 = vpack.c.b16 %v235, %v234
  %vm238 = vcmask 64512
  %v240 = vsel %vm238, %v236, 0
  %v243 = vsel %vm238, %v237, 0
  %vm245 = vcmask 1043456
  %v247 = vsel %vm245, %v207, 0
  %249 = vmatprep.subr.bf16.mxu0 0
  %250 = vmatpush1.bf16.msra.mxu0 0
  %251 = vmatprep.subr.bf16.mxu0 0
  %252 = vmatpush1.bf16.msra.mxu0 0
  %253 = vmatprep.subr.bf16.mxu0 0
  %254 = vmatpush1.bf16.msra.mxu0 0
  %255 = vmatprep.subr.bf16.mxu0 0
  %256 = vmatpush1.bf16.msra.mxu0 0
  %257 = vmatprep.subr.bf16.mxu0 0
  %258 = vmatpush1.bf16.msra.mxu0 0
  %259 = vmatprep.subr.bf16.mxu0 0
  %260 = vmatpush1.bf16.msra.mxu0 0
  %261 = vmatprep.subr.bf16.mxu0 0
  %262 = vmatpush1.bf16.msra.mxu0 0
  %263 = vmatprep.subr.bf16.mxu0 0
  %264 = vmatpush1.bf16.msra.mxu0 %v247
  %265 = vmatprep.subr.bf16.mxu0 0
  %266 = vmatpush2.bf16.msra.mxu0 0
  %267 = vmatprep.subr.bf16.mxu0 0
  %268 = vmatpush2.bf16.msra.mxu0 0
  %269 = vmatprep.subr.bf16.mxu0 0
  %270 = vmatpush2.bf16.msra.mxu0 0
  %271 = vmatprep.subr.bf16.mxu0 0
  %272 = vmatpush2.bf16.msra.mxu0 0
  %273 = vmatprep.subr.bf16.mxu0 0
  %274 = vmatpush2.bf16.msra.mxu0 0
  %275 = vmatprep.subr.bf16.mxu0 0
  %276 = vmatpush2.bf16.msra.mxu0 0
  %277 = vmatprep.subr.bf16.mxu0 0
  %278 = vmatpush2.bf16.msra.mxu0 0
  %279 = vmatprep.subr.bf16.mxu0 0
  %280 = vmatpush2.bf16.msra.mxu0 0
  %281 = vmatprep.mubr.bf16.mxu0 0
  %282 = vmatmul.mubr.bf16.gmra.mxu0 %v240
  %v283 = vpop.f32.mrf.mxu0
  %v284 = vadd.f32 %v211, %v283
  %v285 = vpop.f32.mrf.mxu0
  %v286 = vpop.f32.mrf.mxu0
  %v287 = vadd.f32 %v216, %v286
  %v288 = vpop.f32.mrf.mxu0
  %289 = vmatprep.mubr.bf16.mxu0 0
  %290 = vmatmul.mubr.bf16.gmra.mxu0 %v243
  %v291 = vpop.f32.mrf.mxu0
  %v292 = vadd.f32 %v221, %v291
  %v293 = vpop.f32.mrf.mxu0
  %v294 = vpop.f32.mrf.mxu0
  %v295 = vadd.f32 %v226, %v294
  %v296 = vpop.f32.mrf.mxu0
  %297 = vdwg.mxu0
  %v298 = vmul.f32 %v284, %v284
  %v299 = vmul.f32 %v287, %v287
  %v300 = vmul.f32 %v292, %v292
  %v301 = vmul.f32 %v295, %v295
  %v302 = vmul.f32 %v284, %v298
  %v303 = vmul.f32 %v287, %v299
  %v304 = vmul.f32 %v292, %v300
  %v305 = vmul.f32 %v295, %v301
  %v306 = vmul.f32 %v302, 0.044715
  %v307 = vmul.f32 %v303, 0.044715
  %v308 = vmul.f32 %v304, 0.044715
  %v309 = vmul.f32 %v305, 0.044715
  %v310 = vadd.f32 %v284, %v306
  %v311 = vadd.f32 %v287, %v307
  %v312 = vadd.f32 %v292, %v308
  %v313 = vadd.f32 %v295, %v309
  %v314 = vmul.f32 %v310, 0.7978846
  %v315 = vmul.f32 %v311, 0.7978846
  %v316 = vmul.f32 %v312, 0.7978846
  %v317 = vmul.f32 %v313, 0.7978846
  %v318 = vtanh.pop %v314
  %v319 = vtanh.pop %v315
  %v320 = vtanh.pop %v316
  %v321 = vtanh.pop %v317
  %v322 = vadd.f32 %v318, 1.0
  %v323 = vadd.f32 %v319, 1.0
  %v324 = vadd.f32 %v320, 1.0
  %v325 = vadd.f32 %v321, 1.0
  %v326 = vmul.f32 %v322, 0.5
  %v327 = vmul.f32 %v323, 0.5
  %v328 = vmul.f32 %v324, 0.5
  %v329 = vmul.f32 %v325, 0.5
  %v330 = vmul.f32 %v284, %v326
  %v331 = vmul.f32 %v287, %v327
  %v332 = vmul.f32 %v292, %v328
  %v333 = vmul.f32 %v295, %v329
  %v334 = vpack.c.bf16 %v331, %v330
  %v335 = vpack.c.bf16 %v333, %v332
  %337 = vset.pattern.permute.xlu0 0
  %338 = vperm.xlu0 %337, %v69
  %v339 = vpop.permute.xlu0 %338
  %v342 = vsel %vm163, %v41, 0
  %344 = vmatprep.subr.bf16.mxu0 0
  %345 = vmatpush1.bf16.msra.mxu0 0
  %346 = vmatprep.subr.bf16.mxu0 0
  %347 = vmatpush1.bf16.msra.mxu0 0
  %348 = vmatprep.subr.bf16.mxu0 0
  %349 = vmatpush1.bf16.msra.mxu0 0
  %350 = vmatprep.subr.bf16.mxu0 0
  %351 = vmatpush1.bf16.msra.mxu0 0
  %352 = vmatprep.subr.bf16.mxu0 0
  %353 = vmatpush1.bf16.msra.mxu0 0
  %354 = vmatprep.subr.bf16.mxu0 0
  %355 = vmatpush1.bf16.msra.mxu0 0
  %356 = vmatprep.subr.bf16.mxu0 0
  %357 = vmatpush1.bf16.msra.mxu0 %v335
  %358 = vmatprep.subr.bf16.mxu0 0
  %359 = vmatpush1.bf16.msra.mxu0 %v334
  %360 = vmatprep.subr.bf16.mxu0 0
  %361 = vmatpush2.bf16.msra.mxu0 0
  %362 = vmatprep.subr.bf16.mxu0 0
  %363 = vmatpush2.bf16.msra.mxu0 0
  %364 = vmatprep.subr.bf16.mxu0 0
  %365 = vmatpush2.bf16.msra.mxu0 0
  %366 = vmatprep.subr.bf16.mxu0 0
  %367 = vmatpush2.bf16.msra.mxu0 0
  %368 = vmatprep.subr.bf16.mxu0 0
  %369 = vmatpush2.bf16.msra.mxu0 0
  %370 = vmatprep.subr.bf16.mxu0 0
  %371 = vmatpush2.bf16.msra.mxu0 0
  %372 = vmatprep.subr.bf16.mxu0 0
  %373 = vmatpush2.bf16.msra.mxu0 0
  %374 = vmatprep.subr.bf16.mxu0 0
  %375 = vmatpush2.bf16.msra.mxu0 0
  %376 = vmatprep.mubr.bf16.mxu0 0
  %377 = vmatmul.mubr.bf16.gmra.mxu0 %v342
  %v378 = vpop.f32.mrf.mxu0
  %v379 = vadd.f32 %v339, %v378
  %v380 = vpop.f32.mrf.mxu0
  %v381 = vpop.f32.mrf.mxu0
  %v382 = vpop.f32.mrf.mxu0
  %383 = vdwg.mxu0
  %v385 = vrot.slane %v207, 4
  %v387 = vsel %vm245, %v385, 0
  %389 = vmatprep.subr.bf16.mxu0 0
  %390 = vmatpush1.bf16.msra.mxu0 0
  %391 = vmatprep.subr.bf16.mxu0 0
  %392 = vmatpush1.bf16.msra.mxu0 0
  %393 = vmatprep.subr.bf16.mxu0 0
  %394 = vmatpush1.bf16.msra.mxu0 0
  %395 = vmatprep.subr.bf16.mxu0 0
  %396 = vmatpush1.bf16.msra.mxu0 0
  %397 = vmatprep.subr.bf16.mxu0 0
  %398 = vmatpush1.bf16.msra.mxu0 0
  %399 = vmatprep.subr.bf16.mxu0 0
  %400 = vmatpush1.bf16.msra.mxu0 0
  %401 = vmatprep.subr.bf16.mxu0 0
  %402 = vmatpush1.bf16.msra.mxu0 0
  %403 = vmatprep.subr.bf16.mxu0 0
  %404 = vmatpush1.bf16.msra.mxu0 %v387
  %405 = vmatprep.subr.bf16.mxu0 0
  %406 = vmatpush2.bf16.msra.mxu0 0
  %407 = vmatprep.subr.bf16.mxu0 0
  %408 = vmatpush2.bf16.msra.mxu0 0
  %409 = vmatprep.subr.bf16.mxu0 0
  %410 = vmatpush2.bf16.msra.mxu0 0
  %411 = vmatprep.subr.bf16.mxu0 0
  %412 = vmatpush2.bf16.msra.mxu0 0
  %413 = vmatprep.subr.bf16.mxu0 0
  %414 = vmatpush2.bf16.msra.mxu0 0
  %415 = vmatprep.subr.bf16.mxu0 0
  %416 = vmatpush2.bf16.msra.mxu0 0
  %417 = vmatprep.subr.bf16.mxu0 0
  %418 = vmatpush2.bf16.msra.mxu0 0
  %419 = vmatprep.subr.bf16.mxu0 0
  %420 = vmatpush2.bf16.msra.mxu0 0
  %421 = vmatprep.mubr.bf16.mxu0 0
  %422 = vmatmul.mubr.bf16.gmra.mxu0 %v240
  %v423 = vpop.f32.mrf.mxu0
  %v424 = vadd.f32 %v211, %v423
  %v425 = vpop.f32.mrf.mxu0
  %v426 = vpop.f32.mrf.mxu0
  %v427 = vadd.f32 %v216, %v426
  %v428 = vpop.f32.mrf.mxu0
  %429 = vmatprep.mubr.bf16.mxu0 0
  %430 = vmatmul.mubr.bf16.gmra.mxu0 %v243
  %v431 = vpop.f32.mrf.mxu0
  %v432 = vadd.f32 %v221, %v431
  %v433 = vpop.f32.mrf.mxu0
  %v434 = vpop.f32.mrf.mxu0
  %v435 = vadd.f32 %v226, %v434
  %v436 = vpop.f32.mrf.mxu0
  %437 = vdwg.mxu0
  %v438 = vmul.f32 %v424, %v424
  %v439 = vmul.f32 %v427, %v427
  %v440 = vmul.f32 %v432, %v432
  %v441 = vmul.f32 %v435, %v435
  %v442 = vmul.f32 %v424, %v438
  %v443 = vmul.f32 %v427, %v439
  %v444 = vmul.f32 %v432, %v440
  %v445 = vmul.f32 %v435, %v441
  %v446 = vmul.f32 %v442, 0.044715
  %v447 = vmul.f32 %v443, 0.044715
  %v448 = vmul.f32 %v444, 0.044715
  %v449 = vmul.f32 %v445, 0.044715
  %v450 = vadd.f32 %v424, %v446
  %v451 = vadd.f32 %v427, %v447
  %v452 = vadd.f32 %v432, %v448
  %v453 = vadd.f32 %v435, %v449
  %v454 = vmul.f32 %v450, 0.7978846
  %v455 = vmul.f32 %v451, 0.7978846
  %v456 = vmul.f32 %v452, 0.7978846
  %v457 = vmul.f32 %v453, 0.7978846
  %v458 = vtanh.pop %v454
  %v459 = vtanh.pop %v455
  %v460 = vtanh.pop %v456
  %v461 = vtanh.pop %v457
  %v462 = vadd.f32 %v458, 1.0
  %v463 = vadd.f32 %v459, 1.0
  %v464 = vadd.f32 %v460, 1.0
  %v465 = vadd.f32 %v461, 1.0
  %v466 = vmul.f32 %v462, 0.5
  %v467 = vmul.f32 %v463, 0.5
  %v468 = vmul.f32 %v464, 0.5
  %v469 = vmul.f32 %v465, 0.5
  %v470 = vmul.f32 %v424, %v466
  %v471 = vmul.f32 %v427, %v467
  %v472 = vmul.f32 %v432, %v468
  %v473 = vmul.f32 %v435, %v469
  %v474 = vpack.c.bf16 %v471, %v470
  %v475 = vpack.c.bf16 %v473, %v472
  %476 = vmatprep.subr.bf16.mxu0 0
  %477 = vmatpush1.bf16.msra.mxu0 0
  %478 = vmatprep.subr.bf16.mxu0 0
  %479 = vmatpush1.bf16.msra.mxu0 0
  %480 = vmatprep.subr.bf16.mxu0 0
  %481 = vmatpush1.bf16.msra.mxu0 0
  %482 = vmatprep.subr.bf16.mxu0 0
  %483 = vmatpush1.bf16.msra.mxu0 0
  %484 = vmatprep.subr.bf16.mxu0 0
  %485 = vmatpush1.bf16.msra.mxu0 0
  %486 = vmatprep.subr.bf16.mxu0 0
  %487 = vmatpush1.bf16.msra.mxu0 0
  %488 = vmatprep.subr.bf16.mxu0 0
  %489 = vmatpush1.bf16.msra.mxu0 %v475
  %490 = vmatprep.subr.bf16.mxu0 0
  %491 = vmatpush1.bf16.msra.mxu0 %v474
  %492 = vmatprep.subr.bf16.mxu0 0
  %493 = vmatpush2.bf16.msra.mxu0 0
  %494 = vmatprep.subr.bf16.mxu0 0
  %495 = vmatpush2.bf16.msra.mxu0 0
  %496 = vmatprep.subr.bf16.mxu0 0
  %497 = vmatpush2.bf16.msra.mxu0 0
  %498 = vmatprep.subr.bf16.mxu0 0
  %499 = vmatpush2.bf16.msra.mxu0 0
  %500 = vmatprep.subr.bf16.mxu0 0
  %501 = vmatpush2.bf16.msra.mxu0 0
  %502 = vmatprep.subr.bf16.mxu0 0
  %503 = vmatpush2.bf16.msra.mxu0 0
  %504 = vmatprep.subr.bf16.mxu0 0
  %505 = vmatpush2.bf16.msra.mxu0 0
  %506 = vmatprep.subr.bf16.mxu0 0
  %507 = vmatpush2.bf16.msra.mxu0 0
  %508 = vmatprep.mubr.bf16.mxu0 0
  %509 = vmatmul.mubr.bf16.gmra.mxu0 %v342
  %v510 = vpop.f32.mrf.mxu0
  %v511 = vadd.f32 %v339, %v510
  %v512 = vpop.f32.mrf.mxu0
  %v513 = vpop.f32.mrf.mxu0
  %v514 = vpop.f32.mrf.mxu0
  %515 = vdwg.mxu0
  %v516 = vadd.f32 %v157, %v379
  %v517 = vadd.f32 %v160, %v511
  %v518 = vsel %vm163, %v516, 0.0
  %519 = vadd.xlane.f32.xlu0 %v518
  %v520 = vpop.xlane.xlu0 %519
  %v521 = vsel %vm163, %v517, 0.0
  %522 = vadd.xlane.f32.xlu0 %v521
  %v523 = vpop.xlane.xlu0 %522
  %v524 = vmul.f32 %v520, %v170
  %v525 = vmul.f32 %v523, %v170
  %v526 = vmul.f32 %v516, %v516
  %v527 = vmul.f32 %v517, %v517
  %v528 = vsel %vm163, %v526, 0.0
  %529 = vadd.xlane.f32.xlu0 %v528
  %v530 = vpop.xlane.xlu0 %529
  %v531 = vsel %vm163, %v527, 0.0
  %532 = vadd.xlane.f32.xlu0 %v531
  %v533 = vpop.xlane.xlu0 %532
  %v534 = vmul.f32 %v530, %v170
  %v535 = vmul.f32 %v533, %v170
  %v536 = vmul.f32 %v524, %v524
  %v537 = vmul.f32 %v525, %v525
  %v538 = vsub.f32 %v534, %v536
  %v539 = vsub.f32 %v535, %v537
  %v540 = vsub.f32 %v516, %v524
  %v541 = vsub.f32 %v517, %v525
  %v542 = vadd.f32 %v538, 1e-05
  %v543 = vadd.f32 %v539, 1e-05
  %v544 = vrsqrt.pop %v542
  %v545 = vrsqrt.pop %v543
  %v546 = vmul.f32 %v540, %v544
  %v547 = vmul.f32 %v541, %v545
  %v548 = vlaneseq
  %v549 = vshrl.u32 %v548, 7
  %v550 = vsub.s32 3, %v549
  %v551 = vrot.slane %v63, %v550
  %v552 = vmul.f32 %v546, %v551
  %v553 = vmul.f32 %v547, %v551
  %v554 = vlaneseq
  %v555 = vshrl.u32 %v554, 7
  %v556 = vsub.s32 4, %v555
  %v557 = vrot.slane %v63, %v556
  %v558 = vadd.f32 %v552, %v557
  %v559 = vadd.f32 %v553, %v557
  %v560 = vpack.c.bf16 %v559, %v558
  %v561 = vlaneseq
  %v562 = vshrl.u32 %v561, 7
  %v563 = vsub.s32 5, %v562
  %v564 = vrot.slane %v63, %v563
  %v569 = vunpack.c.l.b16 %v42
  %v570 = vunpack.c.l.b16 %v43
  %v571 = vunpack.c.l.b16 %v44
  %v572 = vunpack.c.l.b16 %v45
  %v573 = vpack.c.b16 %v570, %v569
  %v574 = vpack.c.b16 %v572, %v571
  %v578 = vsel %vm163, %v560, 0
  %580 = vmatprep.subr.bf16.mxu0 0
  %581 = vmatpush1.bf16.msra.mxu0 0
  %582 = vmatprep.subr.bf16.mxu0 0
  %583 = vmatpush1.bf16.msra.mxu0 0
  %584 = vmatprep.subr.bf16.mxu0 0
  %585 = vmatpush1.bf16.msra.mxu0 0
  %586 = vmatprep.subr.bf16.mxu0 0
  %587 = vmatpush1.bf16.msra.mxu0 0
  %588 = vmatprep.subr.bf16.mxu0 0
  %589 = vmatpush1.bf16.msra.mxu0 0
  %590 = vmatprep.subr.bf16.mxu0 0
  %591 = vmatpush1.bf16.msra.mxu0 0
  %592 = vmatprep.subr.bf16.mxu0 0
  %593 = vmatpush1.bf16.msra.mxu0 %v574
  %594 = vmatprep.subr.bf16.mxu0 0
  %595 = vmatpush1.bf16.msra.mxu0 %v573
  %596 = vmatprep.subr.bf16.mxu0 0
  %597 = vmatpush2.bf16.msra.mxu0 0
  %598 = vmatprep.subr.bf16.mxu0 0
  %599 = vmatpush2.bf16.msra.mxu0 0
  %600 = vmatprep.subr.bf16.mxu0 0
  %601 = vmatpush2.bf16.msra.mxu0 0
  %602 = vmatprep.subr.bf16.mxu0 0
  %603 = vmatpush2.bf16.msra.mxu0 0
  %604 = vmatprep.subr.bf16.mxu0 0
  %605 = vmatpush2.bf16.msra.mxu0 0
  %606 = vmatprep.subr.bf16.mxu0 0
  %607 = vmatpush2.bf16.msra.mxu0 0
  %608 = vmatprep.subr.bf16.mxu0 0
  %609 = vmatpush2.bf16.msra.mxu0 0
  %610 = vmatprep.subr.bf16.mxu0 0
  %611 = vmatpush2.bf16.msra.mxu0 0
  %612 = vmatprep.mubr.bf16.mxu0 0
  %613 = vmatmul.mubr.bf16.gmra.mxu0 %v578
  %v614 = vpop.f32.mrf.mxu0
  %v615 = vadd.f32 %v564, %v614
  %v616 = vpop.f32.mrf.mxu0
  %v617 = vpop.f32.mrf.mxu0
  %v618 = vadd.f32 %v564, %v617
  %v619 = vpop.f32.mrf.mxu0
  %620 = vdwg.mxu0
  %v621 = vmul.f32 %v615, %v615
  %v622 = vmul.f32 %v618, %v618
  %v623 = vmul.f32 %v615, %v621
  %v624 = vmul.f32 %v618, %v622
  %v625 = vmul.f32 %v623, 0.044715
  %v626 = vmul.f32 %v624, 0.044715
  %v627 = vadd.f32 %v615, %v625
  %v628 = vadd.f32 %v618, %v626
  %v629 = vmul.f32 %v627, 0.7978846
  %v630 = vmul.f32 %v628, 0.7978846
  %v631 = vtanh.pop %v629
  %v632 = vtanh.pop %v630
  %v633 = vadd.f32 %v631, 1.0
  %v634 = vadd.f32 %v632, 1.0
  %v635 = vmul.f32 %v633, 0.5
  %v636 = vmul.f32 %v634, 0.5
  %v637 = vmul.f32 %v615, %v635
  %v638 = vmul.f32 %v618, %v636
  %v639 = vpack.c.bf16 %v638, %v637
  %v644 = vunpack.c.l.b16 %v46
  %v645 = vunpack.c.l.b16 %v47
  %v646 = vunpack.c.l.b16 %v48
  %v647 = vunpack.c.l.b16 %v49
  %v648 = vpack.c.b16 %v645, %v644
  %v649 = vpack.c.b16 %v647, %v646
  %v653 = vsel %vm163, %v639, 0
  %655 = vmatprep.subr.bf16.mxu0 0
  %656 = vmatpush1.bf16.msra.mxu0 0
  %657 = vmatprep.subr.bf16.mxu0 0
  %658 = vmatpush1.bf16.msra.mxu0 0
  %659 = vmatprep.subr.bf16.mxu0 0
  %660 = vmatpush1.bf16.msra.mxu0 0
  %661 = vmatprep.subr.bf16.mxu0 0
  %662 = vmatpush1.bf16.msra.mxu0 0
  %663 = vmatprep.subr.bf16.mxu0 0
  %664 = vmatpush1.bf16.msra.mxu0 0
  %665 = vmatprep.subr.bf16.mxu0 0
  %666 = vmatpush1.bf16.msra.mxu0 0
  %667 = vmatprep.subr.bf16.mxu0 0
  %668 = vmatpush1.bf16.msra.mxu0 %v649
  %669 = vmatprep.subr.bf16.mxu0 0
  %670 = vmatpush1.bf16.msra.mxu0 %v648
  %671 = vmatprep.subr.bf16.mxu0 0
  %672 = vmatpush2.bf16.msra.mxu0 0
  %673 = vmatprep.subr.bf16.mxu0 0
  %674 = vmatpush2.bf16.msra.mxu0 0
  %675 = vmatprep.subr.bf16.mxu0 0
  %676 = vmatpush2.bf16.msra.mxu0 0
  %677 = vmatprep.subr.bf16.mxu0 0
  %678 = vmatpush2.bf16.msra.mxu0 0
  %679 = vmatprep.subr.bf16.mxu0 0
  %680 = vmatpush2.bf16.msra.mxu0 0
  %681 = vmatprep.subr.bf16.mxu0 0
  %682 = vmatpush2.bf16.msra.mxu0 0
  %683 = vmatprep.subr.bf16.mxu0 0
  %684 = vmatpush2.bf16.msra.mxu0 0
  %685 = vmatprep.subr.bf16.mxu0 0
  %686 = vmatpush2.bf16.msra.mxu0 0
  %687 = vmatprep.mubr.bf16.mxu0 0
  %688 = vmatmul.mubr.bf16.gmra.mxu0 %v653
  %v689 = vpop.f32.mrf.mxu0
  %v690 = vadd.f32 0.0, %v689
  %v691 = vpop.f32.mrf.mxu0
  %v692 = vpop.f32.mrf.mxu0
  %v693 = vadd.f32 0.0, %v692
  %v694 = vpop.f32.mrf.mxu0
  %695 = vdwg.mxu0
  %v696 = vadd.f32 %v516, %v690
  %v697 = vadd.f32 %v517, %v693
  %v698 = vlaneseq
  %v699 = vshrl.u32 %v698, 7
  %v700 = vsub.s32 6, %v699
  %v701 = vrot.slane %v63, %v700
  %v702 = vadd.f32 %v696, %v701
  %v703 = vadd.f32 %v697, %v701
  %v704 = vsel %vm163, %v702, 0.0
  %705 = vadd.xlane.f32.xlu0 %v704
  %v706 = vpop.xlane.xlu0 %705
  %v707 = vsel %vm163, %v703, 0.0
  %708 = vadd.xlane.f32.xlu0 %v707
  %v709 = vpop.xlane.xlu0 %708
  %v710 = vmul.f32 %v706, %v170
  %v711 = vmul.f32 %v709, %v170
  %v712 = vmul.f32 %v702, %v702
  %v713 = vmul.f32 %v703, %v703
  %v714 = vsel %vm163, %v712, 0.0
  %715 = vadd.xlane.f32.xlu0 %v714
  %v716 = vpop.xlane.xlu0 %715
  %v717 = vsel %vm163, %v713, 0.0
  %718 = vadd.xlane.f32.xlu0 %v717
  %v719 = vpop.xlane.xlu0 %718
  %v720 = vmul.f32 %v716, %v170
  %v721 = vmul.f32 %v719, %v170
  %v722 = vmul.f32 %v710, %v710
  %v723 = vmul.f32 %v711, %v711
  %v724 = vsub.f32 %v720, %v722
  %v725 = vsub.f32 %v721, %v723
  %v726 = vsub.f32 %v702, %v710
  %v727 = vsub.f32 %v703, %v711
  %v728 = vadd.f32 %v724, 1e-05
  %v729 = vadd.f32 %v725, 1e-05
  %v730 = vrsqrt.pop %v728
  %v731 = vrsqrt.pop %v729
  %v732 = vmul.f32 %v726, %v730
  %v733 = vmul.f32 %v727, %v731
  %v734 = vlaneseq
  %v735 = vshrl.u32 %v734, 7
  %v736 = vsub.s32 7, %v735
  %v737 = vrot.slane %v63, %v736
  %v738 = vmul.f32 %v732, %v737
  %v739 = vmul.f32 %v733, %v737
  %v740 = vlaneseq
  %v741 = vshrl.u32 %v740, 7
  %v742 = vsub.s32 0, %v741
  %v743 = vrot.slane %v64, %v742
  %v744 = vadd.f32 %v738, %v743
  %v745 = vadd.f32 %v739, %v743
  %v746 = vpack.c.bf16 %v745, %v744
  %748 = vset.pattern.permute.xlu0 0
  %749 = vperm.xlu0 %748, %v70
  %v750 = vpop.permute.xlu0 %749
  %753 = vset.pattern.permute.xlu0 0
  %754 = vperm.xlu0 %753, %v71
  %v755 = vpop.permute.xlu0 %754
  %758 = vset.pattern.permute.xlu0 0
  %759 = vperm.xlu0 %758, %v72
  %v760 = vpop.permute.xlu0 %759
  %763 = vset.pattern.permute.xlu0 0
  %764 = vperm.xlu0 %763, %v73
  %v765 = vpop.permute.xlu0 %764
  %v771 = vunpack.c.l.b16 %v50
  %v772 = vunpack.c.l.b16 %v51
  %v773 = vunpack.c.l.b16 %v52
  %v774 = vunpack.c.l.b16 %v53
  %v775 = vpack.c.b16 %v772, %v771
  %v776 = vpack.c.b16 %v774, %v773
  %v778 = vsel %vm238, %v775, 0
  %v781 = vsel %vm238, %v776, 0
  %v784 = vsel %vm245, %v746, 0
  %786 = vmatprep.subr.bf16.mxu0 0
  %787 = vmatpush1.bf16.msra.mxu0 0
  %788 = vmatprep.subr.bf16.mxu0 0
  %789 = vmatpush1.bf16.msra.mxu0 0
  %790 = vmatprep.subr.bf16.mxu0 0
  %791 = vmatpush1.bf16.msra.mxu0 0
  %792 = vmatprep.subr.bf16.mxu0 0
  %793 = vmatpush1.bf16.msra.mxu0 0
  %794 = vmatprep.subr.bf16.mxu0 0
  %795 = vmatpush1.bf16.msra.mxu0 0
  %796 = vmatprep.subr.bf16.mxu0 0
  %797 = vmatpush1.bf16.msra.mxu0 0
  %798 = vmatprep.subr.bf16.mxu0 0
  %799 = vmatpush1.bf16.msra.mxu0 0
  %800 = vmatprep.subr.bf16.mxu0 0
  %801 = vmatpush1.bf16.msra.mxu0 %v784
  %802 = vmatprep.subr.bf16.mxu0 0
  %803 = vmatpush2.bf16.msra.mxu0 0
  %804 = vmatprep.subr.bf16.mxu0 0
  %805 = vmatpush2.bf16.msra.mxu0 0
  %806 = vmatprep.subr.bf16.mxu0 0
  %807 = vmatpush2.bf16.msra.mxu0 0
  %808 = vmatprep.subr.bf16.mxu0 0
  %809 = vmatpush2.bf16.msra.mxu0 0
  %810 = vmatprep.subr.bf16.mxu0 0
  %811 = vmatpush2.bf16.msra.mxu0 0
  %812 = vmatprep.subr.bf16.mxu0 0
  %813 = vmatpush2.bf16.msra.mxu0 0
  %814 = vmatprep.subr.bf16.mxu0 0
  %815 = vmatpush2.bf16.msra.mxu0 0
  %816 = vmatprep.subr.bf16.mxu0 0
  %817 = vmatpush2.bf16.msra.mxu0 0
  %818 = vmatprep.mubr.bf16.mxu0 0
  %819 = vmatmul.mubr.bf16.gmra.mxu0 %v778
  %v820 = vpop.f32.mrf.mxu0
  %v821 = vadd.f32 %v750, %v820
  %v822 = vpop.f32.mrf.mxu0
  %v823 = vpop.f32.mrf.mxu0
  %v824 = vadd.f32 %v755, %v823
  %v825 = vpop.f32.mrf.mxu0
  %826 = vmatprep.mubr.bf16.mxu0 0
  %827 = vmatmul.mubr.bf16.gmra.mxu0 %v781
  %v828 = vpop.f32.mrf.mxu0
  %v829 = vadd.f32 %v760, %v828
  %v830 = vpop.f32.mrf.mxu0
  %v831 = vpop.f32.mrf.mxu0
  %v832 = vadd.f32 %v765, %v831
  %v833 = vpop.f32.mrf.mxu0
  %834 = vdwg.mxu0
  %v835 = vmul.f32 %v821, %v821
  %v836 = vmul.f32 %v824, %v824
  %v837 = vmul.f32 %v829, %v829
  %v838 = vmul.f32 %v832, %v832
  %v839 = vmul.f32 %v821, %v835
  %v840 = vmul.f32 %v824, %v836
  %v841 = vmul.f32 %v829, %v837
  %v842 = vmul.f32 %v832, %v838
  %v843 = vmul.f32 %v839, 0.044715
  %v844 = vmul.f32 %v840, 0.044715
  %v845 = vmul.f32 %v841, 0.044715
  %v846 = vmul.f32 %v842, 0.044715
  %v847 = vadd.f32 %v821, %v843
  %v848 = vadd.f32 %v824, %v844
  %v849 = vadd.f32 %v829, %v845
  %v850 = vadd.f32 %v832, %v846
  %v851 = vmul.f32 %v847, 0.7978846
  %v852 = vmul.f32 %v848, 0.7978846
  %v853 = vmul.f32 %v849, 0.7978846
  %v854 = vmul.f32 %v850, 0.7978846
  %v855 = vtanh.pop %v851
  %v856 = vtanh.pop %v852
  %v857 = vtanh.pop %v853
  %v858 = vtanh.pop %v854
  %v859 = vadd.f32 %v855, 1.0
  %v860 = vadd.f32 %v856, 1.0
  %v861 = vadd.f32 %v857, 1.0
  %v862 = vadd.f32 %v858, 1.0
  %v863 = vmul.f32 %v859, 0.5
  %v864 = vmul.f32 %v860, 0.5
  %v865 = vmul.f32 %v861, 0.5
  %v866 = vmul.f32 %v862, 0.5
  %v867 = vmul.f32 %v821, %v863
  %v868 = vmul.f32 %v824, %v864
  %v869 = vmul.f32 %v829, %v865
  %v870 = vmul.f32 %v832, %v866
  %v871 = vpack.c.bf16 %v868, %v867
  %v872 = vpack.c.bf16 %v870, %v869
  %874 = vset.pattern.permute.xlu0 0
  %875 = vperm.xlu0 %874, %v74
  %v876 = vpop.permute.xlu0 %875
  %v879 = vsel %vm163, %v54, 0
  %881 = vmatprep.subr.bf16.mxu0 0
  %882 = vmatpush1.bf16.msra.mxu0 0
  %883 = vmatprep.subr.bf16.mxu0 0
  %884 = vmatpush1.bf16.msra.mxu0 0
  %885 = vmatprep.subr.bf16.mxu0 0
  %886 = vmatpush1.bf16.msra.mxu0 0
  %887 = vmatprep.subr.bf16.mxu0 0
  %888 = vmatpush1.bf16.msra.mxu0 0
  %889 = vmatprep.subr.bf16.mxu0 0
  %890 = vmatpush1.bf16.msra.mxu0 0
  %891 = vmatprep.subr.bf16.mxu0 0
  %892 = vmatpush1.bf16.msra.mxu0 0
  %893 = vmatprep.subr.bf16.mxu0 0
  %894 = vmatpush1.bf16.msra.mxu0 %v872
  %895 = vmatprep.subr.bf16.mxu0 0
  %896 = vmatpush1.bf16.msra.mxu0 %v871
  %897 = vmatprep.subr.bf16.mxu0 0
  %898 = vmatpush2.bf16.msra.mxu0 0
  %899 = vmatprep.subr.bf16.mxu0 0
  %900 = vmatpush2.bf16.msra.mxu0 0
  %901 = vmatprep.subr.bf16.mxu0 0
  %902 = vmatpush2.bf16.msra.mxu0 0
  %903 = vmatprep.subr.bf16.mxu0 0
  %904 = vmatpush2.bf16.msra.mxu0 0
  %905 = vmatprep.subr.bf16.mxu0 0
  %906 = vmatpush2.bf16.msra.mxu0 0
  %907 = vmatprep.subr.bf16.mxu0 0
  %908 = vmatpush2.bf16.msra.mxu0 0
  %909 = vmatprep.subr.bf16.mxu0 0
  %910 = vmatpush2.bf16.msra.mxu0 0
  %911 = vmatprep.subr.bf16.mxu0 0
  %912 = vmatpush2.bf16.msra.mxu0 0
  %913 = vmatprep.mubr.bf16.mxu0 0
  %914 = vmatmul.mubr.bf16.gmra.mxu0 %v879
  %v915 = vpop.f32.mrf.mxu0
  %v916 = vadd.f32 %v876, %v915
  %v917 = vpop.f32.mrf.mxu0
  %v918 = vpop.f32.mrf.mxu0
  %v919 = vpop.f32.mrf.mxu0
  %920 = vdwg.mxu0
  %v922 = vrot.slane %v746, 4
  %v924 = vsel %vm245, %v922, 0
  %926 = vmatprep.subr.bf16.mxu0 0
  %927 = vmatpush1.bf16.msra.mxu0 0
  %928 = vmatprep.subr.bf16.mxu0 0
  %929 = vmatpush1.bf16.msra.mxu0 0
  %930 = vmatprep.subr.bf16.mxu0 0
  %931 = vmatpush1.bf16.msra.mxu0 0
  %932 = vmatprep.subr.bf16.mxu0 0
  %933 = vmatpush1.bf16.msra.mxu0 0
  %934 = vmatprep.subr.bf16.mxu0 0
  %935 = vmatpush1.bf16.msra.mxu0 0
  %936 = vmatprep.subr.bf16.mxu0 0
  %937 = vmatpush1.bf16.msra.mxu0 0
  %938 = vmatprep.subr.bf16.mxu0 0
  %939 = vmatpush1.bf16.msra.mxu0 0
  %940 = vmatprep.subr.bf16.mxu0 0
  %941 = vmatpush1.bf16.msra.mxu0 %v924
  %942 = vmatprep.subr.bf16.mxu0 0
  %943 = vmatpush2.bf16.msra.mxu0 0
  %944 = vmatprep.subr.bf16.mxu0 0
  %945 = vmatpush2.bf16.msra.mxu0 0
  %946 = vmatprep.subr.bf16.mxu0 0
  %947 = vmatpush2.bf16.msra.mxu0 0
  %948 = vmatprep.subr.bf16.mxu0 0
  %949 = vmatpush2.bf16.msra.mxu0 0
  %950 = vmatprep.subr.bf16.mxu0 0
  %951 = vmatpush2.bf16.msra.mxu0 0
  %952 = vmatprep.subr.bf16.mxu0 0
  %953 = vmatpush2.bf16.msra.mxu0 0
  %954 = vmatprep.subr.bf16.mxu0 0
  %955 = vmatpush2.bf16.msra.mxu0 0
  %956 = vmatprep.subr.bf16.mxu0 0
  %957 = vmatpush2.bf16.msra.mxu0 0
  %958 = vmatprep.mubr.bf16.mxu0 0
  %959 = vmatmul.mubr.bf16.gmra.mxu0 %v778
  %v960 = vpop.f32.mrf.mxu0
  %v961 = vadd.f32 %v750, %v960
  %v962 = vpop.f32.mrf.mxu0
  %v963 = vpop.f32.mrf.mxu0
  %v964 = vadd.f32 %v755, %v963
  %v965 = vpop.f32.mrf.mxu0
  %966 = vmatprep.mubr.bf16.mxu0 0
  %967 = vmatmul.mubr.bf16.gmra.mxu0 %v781
  %v968 = vpop.f32.mrf.mxu0
  %v969 = vadd.f32 %v760, %v968
  %v970 = vpop.f32.mrf.mxu0
  %v971 = vpop.f32.mrf.mxu0
  %v972 = vadd.f32 %v765, %v971
  %v973 = vpop.f32.mrf.mxu0
  %974 = vdwg.mxu0
  %v975 = vmul.f32 %v961, %v961
  %v976 = vmul.f32 %v964, %v964
  %v977 = vmul.f32 %v969, %v969
  %v978 = vmul.f32 %v972, %v972
  %v979 = vmul.f32 %v961, %v975
  %v980 = vmul.f32 %v964, %v976
  %v981 = vmul.f32 %v969, %v977
  %v982 = vmul.f32 %v972, %v978
  %v983 = vmul.f32 %v979, 0.044715
  %v984 = vmul.f32 %v980, 0.044715
  %v985 = vmul.f32 %v981, 0.044715
  %v986 = vmul.f32 %v982, 0.044715
  %v987 = vadd.f32 %v961, %v983
  %v988 = vadd.f32 %v964, %v984
  %v989 = vadd.f32 %v969, %v985
  %v990 = vadd.f32 %v972, %v986
  %v991 = vmul.f32 %v987, 0.7978846
  %v992 = vmul.f32 %v988, 0.7978846
  %v993 = vmul.f32 %v989, 0.7978846
  %v994 = vmul.f32 %v990, 0.7978846
  %v995 = vtanh.pop %v991
  %v996 = vtanh.pop %v992
  %v997 = vtanh.pop %v993
  %v998 = vtanh.pop %v994
  %v999 = vadd.f32 %v995, 1.0
  %v1000 = vadd.f32 %v996, 1.0
  %v1001 = vadd.f32 %v997, 1.0
  %v1002 = vadd.f32 %v998, 1.0
  %v1003 = vmul.f32 %v999, 0.5
  %v1004 = vmul.f32 %v1000, 0.5
  %v1005 = vmul.f32 %v1001, 0.5
  %v1006 = vmul.f32 %v1002, 0.5
  %v1007 = vmul.f32 %v961, %v1003
  %v1008 = vmul.f32 %v964, %v1004
  %v1009 = vmul.f32 %v969, %v1005
  %v1010 = vmul.f32 %v972, %v1006
  %v1011 = vpack.c.bf16 %v1008, %v1007
  %v1012 = vpack.c.bf16 %v1010, %v1009
  %1013 = vmatprep.subr.bf16.mxu0 0
  %1014 = vmatpush1.bf16.msra.mxu0 0
  %1015 = vmatprep.subr.bf16.mxu0 0
  %1016 = vmatpush1.bf16.msra.mxu0 0
  %1017 = vmatprep.subr.bf16.mxu0 0
  %1018 = vmatpush1.bf16.msra.mxu0 0
  %1019 = vmatprep.subr.bf16.mxu0 0
  %1020 = vmatpush1.bf16.msra.mxu0 0
  %1021 = vmatprep.subr.bf16.mxu0 0
  %1022 = vmatpush1.bf16.msra.mxu0 0
  %1023 = vmatprep.subr.bf16.mxu0 0
  %1024 = vmatpush1.bf16.msra.mxu0 0
  %1025 = vmatprep.subr.bf16.mxu0 0
  %1026 = vmatpush1.bf16.msra.mxu0 %v1012
  %1027 = vmatprep.subr.bf16.mxu0 0
  %1028 = vmatpush1.bf16.msra.mxu0 %v1011
  %1029 = vmatprep.subr.bf16.mxu0 0
  %1030 = vmatpush2.bf16.msra.mxu0 0
  %1031 = vmatprep.subr.bf16.mxu0 0
  %1032 = vmatpush2.bf16.msra.mxu0 0
  %1033 = vmatprep.subr.bf16.mxu0 0
  %1034 = vmatpush2.bf16.msra.mxu0 0
  %1035 = vmatprep.subr.bf16.mxu0 0
  %1036 = vmatpush2.bf16.msra.mxu0 0
  %1037 = vmatprep.subr.bf16.mxu0 0
  %1038 = vmatpush2.bf16.msra.mxu0 0
  %1039 = vmatprep.subr.bf16.mxu0 0
  %1040 = vmatpush2.bf16.msra.mxu0 0
  %1041 = vmatprep.subr.bf16.mxu0 0
  %1042 = vmatpush2.bf16.msra.mxu0 0
  %1043 = vmatprep.subr.bf16.mxu0 0
  %1044 = vmatpush2.bf16.msra.mxu0 0
  %1045 = vmatprep.mubr.bf16.mxu0 0
  %1046 = vmatmul.mubr.bf16.gmra.mxu0 %v879
  %v1047 = vpop.f32.mrf.mxu0
  %v1048 = vadd.f32 %v876, %v1047
  %v1049 = vpop.f32.mrf.mxu0
  %v1050 = vpop.f32.mrf.mxu0
  %v1051 = vpop.f32.mrf.mxu0
  %1052 = vdwg.mxu0
  %v1053 = vadd.f32 %v702, %v916
  %v1054 = vadd.f32 %v703, %v1048
  %v1055 = vsel %vm163, %v1053, 0.0
  %1056 = vadd.xlane.f32.xlu0 %v1055
  %v1057 = vpop.xlane.xlu0 %1056
  %v1058 = vsel %vm163, %v1054, 0.0
  %1059 = vadd.xlane.f32.xlu0 %v1058
  %v1060 = vpop.xlane.xlu0 %1059
  %v1061 = vmul.f32 %v1057, %v170
  %v1062 = vmul.f32 %v1060, %v170
  %v1063 = vmul.f32 %v1053, %v1053
  %v1064 = vmul.f32 %v1054, %v1054
  %v1065 = vsel %vm163, %v1063, 0.0
  %1066 = vadd.xlane.f32.xlu0 %v1065
  %v1067 = vpop.xlane.xlu0 %1066
  %v1068 = vsel %vm163, %v1064, 0.0
  %1069 = vadd.xlane.f32.xlu0 %v1068
  %v1070 = vpop.xlane.xlu0 %1069
  %v1071 = vmul.f32 %v1067, %v170
  %v1072 = vmul.f32 %v1070, %v170
  %v1073 = vmul.f32 %v1061, %v1061
  %v1074 = vmul.f32 %v1062, %v1062
  %v1075 = vsub.f32 %v1071, %v1073
  %v1076 = vsub.f32 %v1072, %v1074
  %v1077 = vsub.f32 %v1053, %v1061
  %v1078 = vsub.f32 %v1054, %v1062
  %v1079 = vadd.f32 %v1075, 1e-05
  %v1080 = vadd.f32 %v1076, 1e-05
  %v1081 = vrsqrt.pop %v1079
  %v1082 = vrsqrt.pop %v1080
  %v1083 = vmul.f32 %v1077, %v1081
  %v1084 = vmul.f32 %v1078, %v1082
  %v1085 = vlaneseq
  %v1086 = vshrl.u32 %v1085, 7
  %v1087 = vsub.s32 1, %v1086
  %v1088 = vrot.slane %v64, %v1087
  %v1089 = vmul.f32 %v1083, %v1088
  %v1090 = vmul.f32 %v1084, %v1088
  %v1091 = vlaneseq
  %v1092 = vshrl.u32 %v1091, 7
  %v1093 = vsub.s32 2, %v1092
  %v1094 = vrot.slane %v64, %v1093
  %v1095 = vadd.f32 %v1089, %v1094
  %v1096 = vadd.f32 %v1090, %v1094
  %v1097 = vpack.c.bf16 %v1096, %v1095
  %v1098 = vlaneseq
  %v1099 = vshrl.u32 %v1098, 7
  %v1100 = vsub.s32 3, %v1099
  %v1101 = vrot.slane %v64, %v1100
  %v1106 = vunpack.c.l.b16 %v55
  %v1107 = vunpack.c.l.b16 %v56
  %v1108 = vunpack.c.l.b16 %v57
  %v1109 = vunpack.c.l.b16 %v58
  %v1110 = vpack.c.b16 %v1107, %v1106
  %v1111 = vpack.c.b16 %v1109, %v1108
  %v1115 = vsel %vm163, %v1097, 0
  %1117 = vmatprep.subr.bf16.mxu0 0
  %1118 = vmatpush1.bf16.msra.mxu0 0
  %1119 = vmatprep.subr.bf16.mxu0 0
  %1120 = vmatpush1.bf16.msra.mxu0 0
  %1121 = vmatprep.subr.bf16.mxu0 0
  %1122 = vmatpush1.bf16.msra.mxu0 0
  %1123 = vmatprep.subr.bf16.mxu0 0
  %1124 = vmatpush1.bf16.msra.mxu0 0
  %1125 = vmatprep.subr.bf16.mxu0 0
  %1126 = vmatpush1.bf16.msra.mxu0 0
  %1127 = vmatprep.subr.bf16.mxu0 0
  %1128 = vmatpush1.bf16.msra.mxu0 0
  %1129 = vmatprep.subr.bf16.mxu0 0
  %1130 = vmatpush1.bf16.msra.mxu0 %v1111
  %1131 = vmatprep.subr.bf16.mxu0 0
  %1132 = vmatpush1.bf16.msra.mxu0 %v1110
  %1133 = vmatprep.subr.bf16.mxu0 0
  %1134 = vmatpush2.bf16.msra.mxu0 0
  %1135 = vmatprep.subr.bf16.mxu0 0
  %1136 = vmatpush2.bf16.msra.mxu0 0
  %1137 = vmatprep.subr.bf16.mxu0 0
  %1138 = vmatpush2.bf16.msra.mxu0 0
  %1139 = vmatprep.subr.bf16.mxu0 0
  %1140 = vmatpush2.bf16.msra.mxu0 0
  %1141 = vmatprep.subr.bf16.mxu0 0
  %1142 = vmatpush2.bf16.msra.mxu0 0
  %1143 = vmatprep.subr.bf16.mxu0 0
  %1144 = vmatpush2.bf16.msra.mxu0 0
  %1145 = vmatprep.subr.bf16.mxu0 0
  %1146 = vmatpush2.bf16.msra.mxu0 0
  %1147 = vmatprep.subr.bf16.mxu0 0
  %1148 = vmatpush2.bf16.msra.mxu0 0
  %1149 = vmatprep.mubr.bf16.mxu0 0
  %1150 = vmatmul.mubr.bf16.gmra.mxu0 %v1115
  %v1151 = vpop.f32.mrf.mxu0
  %v1152 = vadd.f32 %v1101, %v1151
  %v1153 = vpop.f32.mrf.mxu0
  %v1154 = vpop.f32.mrf.mxu0
  %v1155 = vadd.f32 %v1101, %v1154
  %v1156 = vpop.f32.mrf.mxu0
  %1157 = vdwg.mxu0
  %v1158 = vmul.f32 %v1152, %v1152
  %v1159 = vmul.f32 %v1155, %v1155
  %v1160 = vmul.f32 %v1152, %v1158
  %v1161 = vmul.f32 %v1155, %v1159
  %v1162 = vmul.f32 %v1160, 0.044715
  %v1163 = vmul.f32 %v1161, 0.044715
  %v1164 = vadd.f32 %v1152, %v1162
  %v1165 = vadd.f32 %v1155, %v1163
  %v1166 = vmul.f32 %v1164, 0.7978846
  %v1167 = vmul.f32 %v1165, 0.7978846
  %v1168 = vtanh.pop %v1166
  %v1169 = vtanh.pop %v1167
  %v1170 = vadd.f32 %v1168, 1.0
  %v1171 = vadd.f32 %v1169, 1.0
  %v1172 = vmul.f32 %v1170, 0.5
  %v1173 = vmul.f32 %v1171, 0.5
  %v1174 = vmul.f32 %v1152, %v1172
  %v1175 = vmul.f32 %v1155, %v1173
  %v1176 = vpack.c.bf16 %v1175, %v1174
  %v1181 = vunpack.c.l.b16 %v59
  %v1182 = vunpack.c.l.b16 %v60
  %v1183 = vunpack.c.l.b16 %v61
  %v1184 = vunpack.c.l.b16 %v62
  %v1185 = vpack.c.b16 %v1182, %v1181
  %v1186 = vpack.c.b16 %v1184, %v1183
  %v1190 = vsel %vm163, %v1176, 0
  %1192 = vmatprep.subr.bf16.mxu0 0
  %1193 = vmatpush1.bf16.msra.mxu0 0
  %1194 = vmatprep.subr.bf16.mxu0 0
  %1195 = vmatpush1.bf16.msra.mxu0 0
  %1196 = vmatprep.subr.bf16.mxu0 0
  %1197 = vmatpush1.bf16.msra.mxu0 0
  %1198 = vmatprep.subr.bf16.mxu0 0
  %1199 = vmatpush1.bf16.msra.mxu0 0
  %1200 = vmatprep.subr.bf16.mxu0 0
  %1201 = vmatpush1.bf16.msra.mxu0 0
  %1202 = vmatprep.subr.bf16.mxu0 0
  %1203 = vmatpush1.bf16.msra.mxu0 0
  %1204 = vmatprep.subr.bf16.mxu0 0
  %1205 = vmatpush1.bf16.msra.mxu0 %v1186
  %1206 = vmatprep.subr.bf16.mxu0 0
  %1207 = vmatpush1.bf16.msra.mxu0 %v1185
  %1208 = vmatprep.subr.bf16.mxu0 0
  %1209 = vmatpush2.bf16.msra.mxu0 0
  %1210 = vmatprep.subr.bf16.mxu0 0
  %1211 = vmatpush2.bf16.msra.mxu0 0
  %1212 = vmatprep.subr.bf16.mxu0 0
  %1213 = vmatpush2.bf16.msra.mxu0 0
  %1214 = vmatprep.subr.bf16.mxu0 0
  %1215 = vmatpush2.bf16.msra.mxu0 0
  %1216 = vmatprep.subr.bf16.mxu0 0
  %1217 = vmatpush2.bf16.msra.mxu0 0
  %1218 = vmatprep.subr.bf16.mxu0 0
  %1219 = vmatpush2.bf16.msra.mxu0 0
  %1220 = vmatprep.subr.bf16.mxu0 0
  %1221 = vmatpush2.bf16.msra.mxu0 0
  %1222 = vmatprep.subr.bf16.mxu0 0
  %1223 = vmatpush2.bf16.msra.mxu0 0
  %1224 = vmatprep.mubr.bf16.mxu0 0
  %1225 = vmatmul.mubr.bf16.gmra.mxu0 %v1190
  %v1226 = vpop.f32.mrf.mxu0
  %v1227 = vadd.f32 0.0, %v1226
  %v1228 = vpop.f32.mrf.mxu0
  %v1229 = vpop.f32.mrf.mxu0
  %v1230 = vadd.f32 0.0, %v1229
  %v1231 = vpop.f32.mrf.mxu0
  %1232 = vdwg.mxu0
  %v1233 = vadd.f32 %v1053, %v1227
  %v1234 = vadd.f32 %v1054, %v1230
  %v1235 = vlaneseq
  %v1236 = vshrl.u32 %v1235, 7
  %v1237 = vsub.s32 4, %v1236
  %v1238 = vrot.slane %v64, %v1237
  %v1239 = vadd.f32 %v1233, %v1238
  %v1240 = vadd.f32 %v1234, %v1238
  %v1241 = vsel %vm163, %v1239, 0.0
  %1242 = vadd.xlane.f32.xlu0 %v1241
  %v1243 = vpop.xlane.xlu0 %1242
  %v1244 = vsel %vm163, %v1240, 0.0
  %1245 = vadd.xlane.f32.xlu0 %v1244
  %v1246 = vpop.xlane.xlu0 %1245
  %v1247 = vmul.f32 %v1243, %v170
  %v1248 = vmul.f32 %v1246, %v170
  %v1249 = vmul.f32 %v1239, %v1239
  %v1250 = vmul.f32 %v1240, %v1240
  %v1251 = vsel %vm163, %v1249, 0.0
  %1252 = vadd.xlane.f32.xlu0 %v1251
  %v1253 = vpop.xlane.xlu0 %1252
  %v1254 = vsel %vm163, %v1250, 0.0
  %1255 = vadd.xlane.f32.xlu0 %v1254
  %v1256 = vpop.xlane.xlu0 %1255
  %v1257 = vmul.f32 %v1253, %v170
  %v1258 = vmul.f32 %v1256, %v170
  %v1259 = vmul.f32 %v1247, %v1247
  %v1260 = vmul.f32 %v1248, %v1248
  %v1261 = vsub.f32 %v1257, %v1259
  %v1262 = vsub.f32 %v1258, %v1260
  %v1263 = vsub.f32 %v1239, %v1247
  %v1264 = vsub.f32 %v1240, %v1248
  %v1265 = vadd.f32 %v1261, 1e-05
  %v1266 = vadd.f32 %v1262, 1e-05
  %v1267 = vrsqrt.pop %v1265
  %v1268 = vrsqrt.pop %v1266
  %v1269 = vmul.f32 %v1263, %v1267
  %v1270 = vmul.f32 %v1264, %v1268
  %v1271 = vlaneseq
  %v1272 = vshrl.u32 %v1271, 7
  %v1273 = vsub.s32 5, %v1272
  %v1274 = vrot.slane %v64, %v1273
  %v1275 = vmul.f32 %v1269, %v1274
  %v1276 = vmul.f32 %v1270, %v1274
  %v1277 = vlaneseq
  %v1278 = vshrl.u32 %v1277, 7
  %v1279 = vsub.s32 6, %v1278
  %v1280 = vrot.slane %v64, %v1279
  %v1281 = vadd.f32 %v1275, %v1280
  %v1282 = vadd.f32 %v1276, %v1280
  %v1283 = vsel %vm163, %v1281, 0.0
  %v1284 = vrot.slane %v1283, 4
  %v1285 = vadd.f32 %v1283, %v1284
  %v1286 = vrot.slane %v1285, 2
  %v1287 = vadd.f32 %v1285, %v1286
  %v1288 = vrot.slane %v1287, 1
  %v1289 = vadd.f32 %v1287, %v1288
  %v1290 = vsel %vm163, %v1282, 0.0
  %v1291 = vrot.slane %v1290, 4
  %v1292 = vadd.f32 %v1290, %v1291
  %v1293 = vrot.slane %v1292, 2
  %v1294 = vadd.f32 %v1292, %v1293
  %v1295 = vrot.slane %v1294, 1
  %v1296 = vadd.f32 %v1294, %v1295
  %v1297 = vrcp.pop 8.0
  %v1298 = vmul.f32 %v1289, %v1297
  %v1299 = vmul.f32 %v1296, %v1297
  %v1300 = vpack.c.bf16 %v1298, %v1298
  %v1301 = vpack.c.bf16 %v1299, %v1299
  %v1302 = vlaneseq
  %v1303 = vshrl.u32 %v1302, 7
  %v1304 = vsub.s32 7, %v1303
  %v1305 = vrot.slane %v64, %v1304
  %v1308 = vunpack.c.l.b16 %v1300
  %v1309 = vunpack.c.l.b16 %v1301
  %vm1310 = vcmask 1041409
  %v1311 = vsel %vm1310, %v1309, %v1308
  %v1312 = vpack.c.b16 %v1311, %v1311
  %v1317 = vunpack.c.l.b16 %v33
  %v1318 = vunpack.c.l.b16 %v34
  %v1319 = vunpack.c.l.b16 %v35
  %v1320 = vunpack.c.l.b16 %v36
  %v1321 = vpack.c.b16 %v1318, %v1317
  %v1322 = vpack.c.b16 %v1320, %v1319
  %v1326 = vsel %vm163, %v1312, 0
  %1328 = vmatprep.subr.bf16.mxu0 0
  %1329 = vmatpush1.bf16.msra.mxu0 0
  %1330 = vmatprep.subr.bf16.mxu0 0
  %1331 = vmatpush1.bf16.msra.mxu0 0
  %1332 = vmatprep.subr.bf16.mxu0 0
  %1333 = vmatpush1.bf16.msra.mxu0 0
  %1334 = vmatprep.subr.bf16.mxu0 0
  %1335 = vmatpush1.bf16.msra.mxu0 0
  %1336 = vmatprep.subr.bf16.mxu0 0
  %1337 = vmatpush1.bf16.msra.mxu0 0
  %1338 = vmatprep.subr.bf16.mxu0 0
  %1339 = vmatpush1.bf16.msra.mxu0 0
  %1340 = vmatprep.subr.bf16.mxu0 0
  %1341 = vmatpush1.bf16.msra.mxu0 %v1322
  %1342 = vmatprep.subr.bf16.mxu0 0
  %1343 = vmatpush1.bf16.msra.mxu0 %v1321
  %1344 = vmatprep.subr.bf16.mxu0 0
  %1345 = vmatpush2.bf16.msra.mxu0 0
  %1346 = vmatprep.subr.bf16.mxu0 0
  %1347 = vmatpush2.bf16.msra.mxu0 0
  %1348 = vmatprep.subr.bf16.mxu0 0
  %1349 = vmatpush2.bf16.msra.mxu0 0
  %1350 = vmatprep.subr.bf16.mxu0 0
  %1351 = vmatpush2.bf16.msra.mxu0 0
  %1352 = vmatprep.subr.bf16.mxu0 0
  %1353 = vmatpush2.bf16.msra.mxu0 0
  %1354 = vmatprep.subr.bf16.mxu0 0
  %1355 = vmatpush2.bf16.msra.mxu0 0
  %1356 = vmatprep.subr.bf16.mxu0 0
  %1357 = vmatpush2.bf16.msra.mxu0 0
  %1358 = vmatprep.subr.bf16.mxu0 0
  %1359 = vmatpush2.bf16.msra.mxu0 0
  %1360 = vmatprep.mubr.bf16.mxu0 0
  %1361 = vmatmul.mubr.bf16.gmra.mxu0 %v1326
  %v1362 = vpop.f32.mrf.mxu0
  %v1363 = vadd.f32 %v1305, %v1362
  %v1364 = vpop.f32.mrf.mxu0
  %v1365 = vpop.f32.mrf.mxu0
  %v1366 = vpop.f32.mrf.mxu0
  %1367 = vdwg.mxu0
  %v1368 = vxor.u32 %v1363, 2147483648
  %v1369 = vmul.f32 %v1368, 1.442695
  %v1370 = vpow.pop %v1369
  %v1371 = vadd.f32 %v1370, 1.0
  %v1372 = vrcp.pop %v1371
  %v1373 = vmul.f32 1.0, %v1372
  %vm1374 = vcmask 1024
  %1375 = vst.msk [vmem:[%s5] sm:$0x3] %vm1374, %v1373
  // Predicated region
  $region22: #{tpu_custom_call.1} parent=0 // pred_check
    _
  $region23: #{tpu_custom_call.1} parent=0 // pred_check_branch
    %1377 = sbr.rel (0) target = $region25
  $region24: #{tpu_custom_call.1} parent=0 // pred_region
    _
  $region25: #{tpu_custom_call.1} parent=0 // pred_fallthru
    _
  // Predicated region
  $region26: #{tpu_custom_call.1} parent=0 // pred_check
    _
  $region27: #{tpu_custom_call.1} parent=0 // pred_check_branch
    %1379 = sbr.rel (0) target = $region29
  $region28: #{tpu_custom_call.1} parent=0 // pred_region
    _
  $region29: #{tpu_custom_call.1} parent=0 // pred_fallthru
    _

</llo_original>
